<compile_context>
chip_gen: v7x
topology: tpu7x:2x2x1
jax: 0.10.0
libtpu: 0.0.40
codegen_flags: <defaults>
</compile_context>

<pallas_src>
import functools
import math

import jax
import jax.numpy as jnp
from jax.experimental import pallas as pl
from jax.experimental.pallas import tpu as pltpu

NEG_SLOPE = 0.02
LN_EPS = 1e-5


def _leaky(x):
    return jnp.where(x >= 0, x, NEG_SLOPE * x)


def _layernorm(x, gamma, beta):
    # Two-pass (mean-subtracted) variance: robust against catastrophic cancellation.
    mu = jnp.mean(x, axis=-1, keepdims=True)
    xc = x - mu
    var = jnp.mean(xc * xc, axis=-1, keepdims=True)
    return xc * jax.lax.rsqrt(var + LN_EPS) * gamma + beta


def _residual_attention_layer_kernel(
    q_ref, kv_ref,
    wq_ref, wk_ref, wv_ref, bq_ref, bk_ref, bv_ref,
    wo_ref, bo_ref,
    g1_ref, be1_ref,
    w1_ref, b1_ref, w2_ref, b2_ref,
    g2_ref, be2_ref,
    o_ref,
    *, heads, mm_dtype,
):
    Bt, Sq, D = q_ref.shape
    _, Skv, _ = kv_ref.shape
    hd = D // heads
    scale = 1.0 / math.sqrt(hd)

    # Flatten to (rows, D): fat MXU M dimension for every projection / FFN matmul.
    q2 = q_ref[...].reshape(Bt * Sq, D)                        # f32, reused for residual
    q2m = q2.astype(mm_dtype)
    kv2m = kv_ref[...].reshape(Bt * Skv, D).astype(mm_dtype)   # one cast for K & V proj

    # Projections: mm_dtype operands, f32 accumulation.
    # 1/sqrt(hd) folded into Q (incl. bias) once instead of scaling every score tensor.
    Q = (jnp.dot(q2m, wq_ref[...], preferred_element_type=jnp.float32)
         + bq_ref[...]) * scale
    K = jnp.dot(kv2m, wk_ref[...], preferred_element_type=jnp.float32) + bk_ref[...]
    V = jnp.dot(kv2m, wv_ref[...], preferred_element_type=jnp.float32) + bv_ref[...]

    # Single cast of Q/K/V to the matmul dtype; per-head slices below reuse it.
    Qm = Q.astype(mm_dtype).reshape(Bt, Sq, D)
    Km = K.astype(mm_dtype).reshape(Bt, Skv, D)
    Vm = V.astype(mm_dtype).reshape(Bt, Skv, D)

    # Multi-head attention. Softmax math in f32; the denominator is applied to the
    # (Sq, hd) context after P@V (cheaper than rescaling (Sq, Skv) probabilities) using
    # the EUP-side approximate reciprocal.
    # TODO(synk): for heads >= 8 switch to lax.fori_loop over (heads, D, hd)-packed weights.
    ctx_heads = []
    for h in range(heads):  # static unroll over heads (small head counts)
        sl = slice(h * hd, (h + 1) * hd)
        s = jnp.einsum("bqd,bkd->bqk", Qm[:, :, sl], Km[:, :, sl],
                       preferred_element_type=jnp.float32)
        m = jnp.max(s, axis=-1, keepdims=True)
        p = jnp.exp(s - m)
        l = jnp.sum(p, axis=-1, keepdims=True)
        ctx = jnp.einsum("bqk,bkd->bqd", p.astype(mm_dtype), Vm[:, :, sl],
                         preferred_element_type=jnp.float32)
        ctx_heads.append(ctx * pl.reciprocal(l, approx=True))

    # One lane-axis concat, then a single K=D output projection (full MXU K utilization
    # instead of `heads` separate K=hd matmuls).
    ctx_full = ctx_heads[0] if heads == 1 else jnp.concatenate(ctx_heads, axis=-1)
    ctx_full = ctx_full.reshape(Bt * Sq, D).astype(mm_dtype)
    attn = jnp.dot(ctx_full, wo_ref[...],
                   preferred_element_type=jnp.float32) + bo_ref[...]

    # residual + LayerNorm (f32 element-wise math)
    x = _layernorm(attn + q2, g1_ref[...], be1_ref[...])

    # FFN: Linear -> LeakyReLU -> Linear, plus the module's outer LeakyReLU.
    # h1 kept in mm_dtype (largest live activation) after the f32 leaky.
    h1 = _leaky(jnp.dot(x.astype(mm_dtype), w1_ref[...],
                        preferred_element_type=jnp.float32)
                + b1_ref[...]).astype(mm_dtype)
    h2 = _leaky(jnp.dot(h1, w2_ref[...], preferred_element_type=jnp.float32)
                + b2_ref[...])

    # residual + LayerNorm
    y = _layernorm(h2 + x, g2_ref[...], be2_ref[...])
    o_ref[...] = y.reshape(Bt, Sq, D).astype(o_ref.dtype)


def _vmem_budget_bytes():
    """Generation-aware VMEM budget: ~85% of per-core capacity
    (v7x: ~54 of 64 MiB, v5e/v6e: ~109 of 128 MiB)."""
    try:
        cap = int(pltpu.get_tpu_info().vmem_capacity_bytes)
    except Exception:
        cap = 64 << 20  # conservative fallback = v7x per-core capacity
    return int(cap * 0.85)


def _footprint_bytes(Bt, Sq, Skv, D, Dff, mm_bytes):
    """Rough per-grid-step VMEM footprint for a (Bt, Sq/Skv, D) tile."""
    f32 = 4
    weights = (4 * D * D + 2 * D * Dff) * mm_bytes + (9 * D + Dff) * f32
    io = 2 * Bt * (2 * Sq + Skv) * D * f32                 # double-buffered q, out, kv
    acts = (Bt * Sq * D * (5 * f32 + 2 * mm_bytes)         # q2, Q, attn, x, y + Qm, ctx
            + Bt * Skv * D * (2 * f32 + 3 * mm_bytes)      # K, V + kv2m, Km, Vm
            + Bt * Sq * Skv * 2 * f32                      # scores + probs (one head live)
            + Bt * Sq * Dff * (f32 + mm_bytes))            # h1 (f32 pre-cast + mm copy)
    return weights + io + acts


def _pick_batch_tile(B, Sq, Skv, D, Dff, mm_bytes, budget, target_rows):
    """Smallest divisor of B reaching target_rows MXU rows that fits the VMEM budget,
    else the largest fitting divisor, else 1 (never falls back to Bt=B blindly)."""
    divisors = [bt for bt in range(1, B + 1) if B % bt == 0]
    fits = [bt for bt in divisors
            if int(1.3 * _footprint_bytes(bt, Sq, Skv, D, Dff, mm_bytes)) <= budget]
    if not fits:
        return 1
    reach = [bt for bt in fits if bt * Sq >= target_rows]
    return min(reach) if reach else max(fits)


def residual_attention_layer(q, kv, params, *, heads, mm_dtype=jnp.bfloat16):
    """One post-norm block. q: (B, Sq, D), kv: (B, Skv, D), float32 in/out."""
    B, Sq0, D = q.shape
    _, Skv, _ = kv.shape
    Dff = params["w1"].shape[1]
    assert D % heads == 0, "d_model must be divisible by heads"

    # Pad Sq to a multiple of 8 so the (Bt,Sq,D)<->(Bt*Sq,D) reshapes are layout no-ops.
    # Query rows are independent, so zero-padded rows are simply sliced off afterwards.
    pad = (-Sq0) % 8
    if pad:
        q = jnp.pad(q, ((0, 0), (0, pad), (0, 0)))
    Sq = Sq0 + pad
    # NOTE: a non-multiple-of-8 Skv only costs a relayout copy (padding keys would change
    # the softmax), so kv is left untouched.

    mm_bytes = jnp.dtype(mm_dtype).itemsize
    budget = _vmem_budget_bytes()
    target_rows = 512 if budget > (80 << 20) else 256   # bigger tiles on 128 MiB parts
    Bt = _pick_batch_tile(B, Sq, Skv, D, Dff, mm_bytes, budget, target_rows)
    grid = (B // Bt,)

    # Weights / biases / LN params: whole-array VMEM residents (single copy, not pipelined).
    wspec = pl.BlockSpec(memory_space=pltpu.MemorySpace.VMEM)
    in_specs = [
        pl.BlockSpec((Bt, Sq, D), lambda b: (b, 0, 0)),    # q  (pipelined over batch tiles)
        pl.BlockSpec((Bt, Skv, D), lambda b: (b, 0, 0)),   # kv
    ] + [wspec] * 16

    kernel = functools.partial(
        _residual_attention_layer_kernel, heads=heads, mm_dtype=mm_dtype)
    cast_w = lambda w: w.astype(mm_dtype)

    out = pl.pallas_call(
        kernel,
        out_shape=jax.ShapeDtypeStruct((B, Sq, D), jnp.float32),
        grid=grid,
        in_specs=in_specs,
        out_specs=pl.BlockSpec((Bt, Sq, D), lambda b: (b, 0, 0)),
        compiler_params=pltpu.CompilerParams(
            dimension_semantics=("parallel",),
            vmem_limit_bytes=budget,
        ),
        # TODO(synk): input_output_aliases={0: 0} (reuse q's HBM buffer between layers) and
        # a P10 cross-pallas_call prefetch of the next layer's weights.
    )(
        q, kv,
        cast_w(params["wq"]), cast_w(params["wk"]), cast_w(params["wv"]),
        params["bq"], params["bk"], params["bv"],
        cast_w(params["wo"]), params["bo"],
        params["ln1_g"], params["ln1_b"],
        cast_w(params["w1"]), params["b1"], cast_w(params["w2"]), params["b2"],
        params["ln2_g"], params["ln2_b"],
    )
    if pad:
        out = out[:, :Sq0, :]
    return out


def residual_attention(q, kv, layer_params, *, heads, mm_dtype=jnp.bfloat16):
    # TODO(synk): fuse the layer loop into one kernel (kv resident, manual weight
    # double-buffer) to hide the per-layer HBM->VMEM weight copy.
    for params in layer_params:
        q = residual_attention_layer(q, kv, params, heads=heads, mm_dtype=mm_dtype)
    return q


# ---------------- pure-JAX reference (mirrors PyTorch semantics) ----------------
def ref_forward(q, kv, layer_params, heads):
    def ln(x, g, b):
        mu = x.mean(-1, keepdims=True)
        var = ((x - mu) ** 2).mean(-1, keepdims=True)
        return (x - mu) / jnp.sqrt(var + LN_EPS) * g + b

    def leaky(x):
        return jnp.where(x >= 0, x, NEG_SLOPE * x)

    B, Sq, D = q.shape
    Skv = kv.shape[1]
    hd = D // heads
    scale = 1.0 / math.sqrt(hd)
    for p in layer_params:
        Q = (q @ p["wq"] + p["bq"]).reshape(B, Sq, heads, hd).transpose(0, 2, 1, 3)
        K = (kv @ p["wk"] + p["bk"]).reshape(B, Skv, heads, hd).transpose(0, 2, 1, 3)
        V = (kv @ p["wv"] + p["bv"]).reshape(B, Skv, heads, hd).transpose(0, 2, 1, 3)
        s = jnp.einsum("bhqd,bhkd->bhqk", Q, K) * scale
        a = jnp.einsum("bhqk,bhkd->bhqd", jax.nn.softmax(s, axis=-1), V)
        a = a.transpose(0, 2, 1, 3).reshape(B, Sq, D) @ p["wo"] + p["bo"]
        x = ln(a + q, p["ln1_g"], p["ln1_b"])
        h = leaky(x @ p["w1"] + p["b1"]) @ p["w2"] + p["b2"]
        h = leaky(h)
        q = ln(h + x, p["ln2_g"], p["ln2_b"])
    return q


def make_params(key, layers, d_model):
    dff = 4 * d_model
    params = []
    for _ in range(layers):
        keys = jax.random.split(key, 10)
        key = keys[0]
        p = {
            "wq": 0.05 * jax.random.normal(keys[1], (d_model, d_model), jnp.float32),
            "wk": 0.05 * jax.random.normal(keys[2], (d_model, d_model), jnp.float32),
            "wv": 0.05 * jax.random.normal(keys[3], (d_model, d_model), jnp.float32),
            "bq": 0.01 * jax.random.normal(keys[4], (1, d_model), jnp.float32),
            "bk": jnp.zeros((1, d_model), jnp.float32),
            "bv": 0.01 * jax.random.normal(keys[5], (1, d_model), jnp.float32),
            "wo": 0.05 * jax.random.normal(keys[6], (d_model, d_model), jnp.float32),
            "bo": jnp.zeros((1, d_model), jnp.float32),
            "ln1_g": jnp.ones((1, d_model), jnp.float32),
            "ln1_b": jnp.zeros((1, d_model), jnp.float32),
            "w1": 0.05 * jax.random.normal(keys[7], (d_model, dff), jnp.float32),
            "b1": 0.01 * jax.random.normal(keys[8], (1, dff), jnp.float32),
            "w2": 0.05 * jax.random.normal(keys[9], (dff, d_model), jnp.float32),
            "b2": jnp.zeros((1, d_model), jnp.float32),
            "ln2_g": jnp.ones((1, d_model), jnp.float32),
            "ln2_b": jnp.zeros((1, d_model), jnp.float32),
        }
        params.append(p)
    return params


if __name__ == "__main__":
    def run_case(name, layers, heads, d_model, B, Sq, Skv, mm_dtype, tol):
        key = jax.random.PRNGKey(0)
        kq, kkv, kp = jax.random.split(key, 3)
        q = jax.random.normal(kq, (B, Sq, d_model), jnp.float32)
        kv = jax.random.normal(kkv, (B, Skv, d_model), jnp.float32)
        params = make_params(kp, layers, d_model)
        out = jax.block_until_ready(
            residual_attention(q, kv, params, heads=heads, mm_dtype=mm_dtype))
        assert out.shape == (B, Sq, d_model)
        ref = ref_forward(q, kv, params, heads)
        err = float(jnp.max(jnp.abs(out - ref)))
        assert err < tol, f"{name}: max abs err {err} (tol {tol})"

    # single-head, single-layer, full-precision matmuls (tight parity check)
    run_case("single-head-f32", layers=1, heads=1, d_model=128, B=2, Sq=8, Skv=8,
             mm_dtype=jnp.float32, tol=5e-3)
    # multi-head, multi-layer, cross-attention, default bf16 matmuls (looser tolerance)
    run_case("multi-head-bf16", layers=2, heads=4, d_model=128, B=2, Sq=8, Skv=16,
             mm_dtype=jnp.bfloat16, tol=8e-2)
    # non-multiple-of-8 Sq exercises the wrapper-side padding path
    run_case("padded-sq-bf16", layers=1, heads=4, d_model=128, B=2, Sq=6, Skv=16,
             mm_dtype=jnp.bfloat16, tol=8e-2)

    print("KERNEL_OK")
</pallas_src>

<mosaic_0001>
module attributes {stable_mosaic.version = 11 : i64} {
  func.func @_residual_attention_layer_kernel(%arg0: i32, %arg1: memref<2x8x128xf32, #tpu.memory_space<vmem>>, %arg2: memref<2x8x128xf32, #tpu.memory_space<vmem>>, %arg3: memref<128x128xf32, #tpu.memory_space<vmem>>, %arg4: memref<128x128xf32, #tpu.memory_space<vmem>>, %arg5: memref<128x128xf32, #tpu.memory_space<vmem>>, %arg6: memref<1x128xf32, #tpu.memory_space<vmem>>, %arg7: memref<1x128xf32, #tpu.memory_space<vmem>>, %arg8: memref<1x128xf32, #tpu.memory_space<vmem>>, %arg9: memref<128x128xf32, #tpu.memory_space<vmem>>, %arg10: memref<1x128xf32, #tpu.memory_space<vmem>>, %arg11: memref<1x128xf32, #tpu.memory_space<vmem>>, %arg12: memref<1x128xf32, #tpu.memory_space<vmem>>, %arg13: memref<128x512xf32, #tpu.memory_space<vmem>>, %arg14: memref<1x512xf32, #tpu.memory_space<vmem>>, %arg15: memref<512x128xf32, #tpu.memory_space<vmem>>, %arg16: memref<1x128xf32, #tpu.memory_space<vmem>>, %arg17: memref<1x128xf32, #tpu.memory_space<vmem>>, %arg18: memref<1x128xf32, #tpu.memory_space<vmem>>, %arg19: memref<2x8x128xf32, #tpu.memory_space<vmem>>) attributes {dimension_semantics = [#tpu.dimension_semantics<parallel>], iteration_bounds = array<i64: 1>, scalar_prefetch = 0 : i64, scratch_operands = 0 : i64, tpu.core_type = #tpu.core_type<tc>, window_params = [{transform_indices = @transform_0, window_bounds = array<i64: 2, 8, 128>}, {transform_indices = @transform_1, window_bounds = array<i64: 2, 8, 128>}, {pipeline_mode = #tpu.pipeline_mode<synchronous>, transform_indices = @transform_2, window_bounds = array<i64: 128, 128>}, {pipeline_mode = #tpu.pipeline_mode<synchronous>, transform_indices = @transform_3, window_bounds = array<i64: 128, 128>}, {pipeline_mode = #tpu.pipeline_mode<synchronous>, transform_indices = @transform_4, window_bounds = array<i64: 128, 128>}, {pipeline_mode = #tpu.pipeline_mode<synchronous>, transform_indices = @transform_5, window_bounds = array<i64: 1, 128>}, {pipeline_mode = #tpu.pipeline_mode<synchronous>, transform_indices = @transform_6, window_bounds = array<i64: 1, 128>}, {pipeline_mode = #tpu.pipeline_mode<synchronous>, transform_indices = @transform_7, window_bounds = array<i64: 1, 128>}, {pipeline_mode = #tpu.pipeline_mode<synchronous>, transform_indices = @transform_8, window_bounds = array<i64: 128, 128>}, {pipeline_mode = #tpu.pipeline_mode<synchronous>, transform_indices = @transform_9, window_bounds = array<i64: 1, 128>}, {pipeline_mode = #tpu.pipeline_mode<synchronous>, transform_indices = @transform_10, window_bounds = array<i64: 1, 128>}, {pipeline_mode = #tpu.pipeline_mode<synchronous>, transform_indices = @transform_11, window_bounds = array<i64: 1, 128>}, {pipeline_mode = #tpu.pipeline_mode<synchronous>, transform_indices = @transform_12, window_bounds = array<i64: 128, 512>}, {pipeline_mode = #tpu.pipeline_mode<synchronous>, transform_indices = @transform_13, window_bounds = array<i64: 1, 512>}, {pipeline_mode = #tpu.pipeline_mode<synchronous>, transform_indices = @transform_14, window_bounds = array<i64: 512, 128>}, {pipeline_mode = #tpu.pipeline_mode<synchronous>, transform_indices = @transform_15, window_bounds = array<i64: 1, 128>}, {pipeline_mode = #tpu.pipeline_mode<synchronous>, transform_indices = @transform_16, window_bounds = array<i64: 1, 128>}, {pipeline_mode = #tpu.pipeline_mode<synchronous>, transform_indices = @transform_17, window_bounds = array<i64: 1, 128>}, {transform_indices = @transform_18, window_bounds = array<i64: 2, 8, 128>}]} {
    %c0 = arith.constant 0 : index
    %c0_0 = arith.constant 0 : index
    %c0_1 = arith.constant 0 : index
    %0 = vector.load %arg1[%c0, %c0_0, %c0_1] : memref<2x8x128xf32, #tpu.memory_space<vmem>>, vector<2x8x128xf32>
    %1 = vector.shape_cast %0 : vector<2x8x128xf32> to vector<16x128xf32>
    %c0_2 = arith.constant 0 : index
    %c0_3 = arith.constant 0 : index
    %c0_4 = arith.constant 0 : index
    %2 = vector.load %arg2[%c0_2, %c0_3, %c0_4] : memref<2x8x128xf32, #tpu.memory_space<vmem>>, vector<2x8x128xf32>
    %3 = vector.shape_cast %2 : vector<2x8x128xf32> to vector<16x128xf32>
    %c0_5 = arith.constant 0 : index
    %c0_6 = arith.constant 0 : index
    %4 = vector.load %arg3[%c0_5, %c0_6] : memref<128x128xf32, #tpu.memory_space<vmem>>, vector<128x128xf32>
    %cst = arith.constant dense<0.000000e+00> : vector<16x128xf32>
    %5 = tpu.matmul %1, %4, %cst {dimension_numbers = #tpu.dot_dimension_numbers<[1], [0], [0], [1], [0, 0, 1, 1], [], []>} : vector<16x128xf32>, vector<128x128xf32>, vector<16x128xf32> -> vector<16x128xf32>
    %c0_7 = arith.constant 0 : index
    %c0_8 = arith.constant 0 : index
    %6 = vector.load %arg6[%c0_7, %c0_8] : memref<1x128xf32, #tpu.memory_space<vmem>>, vector<1x128xf32>
    %7 = vector.broadcast %6 : vector<1x128xf32> to vector<16x128xf32>
    %8 = arith.addf %5, %7 : vector<16x128xf32>
    %cst_9 = arith.constant 0.0883883461 : f32
    %9 = vector.broadcast %cst_9 : f32 to vector<16x128xf32>
    %10 = arith.mulf %8, %9 : vector<16x128xf32>
    %c0_10 = arith.constant 0 : index
    %c0_11 = arith.constant 0 : index
    %11 = vector.load %arg4[%c0_10, %c0_11] : memref<128x128xf32, #tpu.memory_space<vmem>>, vector<128x128xf32>
    %cst_12 = arith.constant dense<0.000000e+00> : vector<16x128xf32>
    %12 = tpu.matmul %3, %11, %cst_12 {dimension_numbers = #tpu.dot_dimension_numbers<[1], [0], [0], [1], [0, 0, 1, 1], [], []>} : vector<16x128xf32>, vector<128x128xf32>, vector<16x128xf32> -> vector<16x128xf32>
    %c0_13 = arith.constant 0 : index
    %c0_14 = arith.constant 0 : index
    %13 = vector.load %arg7[%c0_13, %c0_14] : memref<1x128xf32, #tpu.memory_space<vmem>>, vector<1x128xf32>
    %14 = vector.broadcast %13 : vector<1x128xf32> to vector<16x128xf32>
    %15 = arith.addf %12, %14 : vector<16x128xf32>
    %c0_15 = arith.constant 0 : index
    %c0_16 = arith.constant 0 : index
    %16 = vector.load %arg5[%c0_15, %c0_16] : memref<128x128xf32, #tpu.memory_space<vmem>>, vector<128x128xf32>
    %cst_17 = arith.constant dense<0.000000e+00> : vector<16x128xf32>
    %17 = tpu.matmul %3, %16, %cst_17 {dimension_numbers = #tpu.dot_dimension_numbers<[1], [0], [0], [1], [0, 0, 1, 1], [], []>} : vector<16x128xf32>, vector<128x128xf32>, vector<16x128xf32> -> vector<16x128xf32>
    %c0_18 = arith.constant 0 : index
    %c0_19 = arith.constant 0 : index
    %18 = vector.load %arg8[%c0_18, %c0_19] : memref<1x128xf32, #tpu.memory_space<vmem>>, vector<1x128xf32>
    %19 = vector.broadcast %18 : vector<1x128xf32> to vector<16x128xf32>
    %20 = arith.addf %17, %19 : vector<16x128xf32>
    %21 = vector.shape_cast %10 : vector<16x128xf32> to vector<2x8x128xf32>
    %22 = vector.shape_cast %15 : vector<16x128xf32> to vector<2x8x128xf32>
    %23 = vector.shape_cast %20 : vector<16x128xf32> to vector<2x8x128xf32>
    "tpu.trace_start"() <{level = 10 : i32, message = "bqd,bkd->bqk"}> : () -> ()
    %cst_20 = arith.constant dense<0.000000e+00> : vector<2x8x8xf32>
    %24 = tpu.matmul %21, %22, %cst_20 {dimension_numbers = #tpu.dot_dimension_numbers<[2], [2], [1], [1], [0, 0, 0, 1, 1, 1], [0], [0]>} : vector<2x8x128xf32>, vector<2x8x128xf32>, vector<2x8x8xf32> -> vector<2x8x8xf32>
    "tpu.trace_stop"() : () -> ()
    %cst_21 = arith.constant dense<0xFF800000> : vector<2x8xf32>
    %25 = vector.multi_reduction <maximumf>, %24, %cst_21 [2] : vector<2x8x8xf32> to vector<2x8xf32>
    %26 = vector.shape_cast %25 : vector<2x8xf32> to vector<2x8x1xf32>
    %27 = vector.broadcast %26 : vector<2x8x1xf32> to vector<2x8x8xf32>
    %28 = arith.subf %24, %27 : vector<2x8x8xf32>
    %29 = math.exp %28 : vector<2x8x8xf32>
    %cst_22 = arith.constant dense<0.000000e+00> : vector<2x8xf32>
    %30 = vector.multi_reduction <add>, %29, %cst_22 [2] : vector<2x8x8xf32> to vector<2x8xf32>
    %31 = vector.shape_cast %30 : vector<2x8xf32> to vector<2x8x1xf32>
    "tpu.trace_start"() <{level = 10 : i32, message = "bqk,bkd->bqd"}> : () -> ()
    %cst_23 = arith.constant dense<0.000000e+00> : vector<2x8x128xf32>
    %32 = tpu.matmul %29, %23, %cst_23 {dimension_numbers = #tpu.dot_dimension_numbers<[2], [1], [1], [2], [0, 0, 0, 1, 1, 2], [0], [0]>} : vector<2x8x8xf32>, vector<2x8x128xf32>, vector<2x8x128xf32> -> vector<2x8x128xf32>
    "tpu.trace_stop"() : () -> ()
    %33 = tpu.reciprocal %31 {approx = true} : vector<2x8x1xf32> -> vector<2x8x1xf32>
    %34 = vector.broadcast %33 : vector<2x8x1xf32> to vector<2x8x128xf32>
    %35 = arith.mulf %32, %34 : vector<2x8x128xf32>
    %36 = vector.shape_cast %35 : vector<2x8x128xf32> to vector<16x128xf32>
    %c0_24 = arith.constant 0 : index
    %c0_25 = arith.constant 0 : index
    %37 = vector.load %arg9[%c0_24, %c0_25] : memref<128x128xf32, #tpu.memory_space<vmem>>, vector<128x128xf32>
    %cst_26 = arith.constant dense<0.000000e+00> : vector<16x128xf32>
    %38 = tpu.matmul %36, %37, %cst_26 {dimension_numbers = #tpu.dot_dimension_numbers<[1], [0], [0], [1], [0, 0, 1, 1], [], []>} : vector<16x128xf32>, vector<128x128xf32>, vector<16x128xf32> -> vector<16x128xf32>
    %c0_27 = arith.constant 0 : index
    %c0_28 = arith.constant 0 : index
    %39 = vector.load %arg10[%c0_27, %c0_28] : memref<1x128xf32, #tpu.memory_space<vmem>>, vector<1x128xf32>
    %40 = vector.broadcast %39 : vector<1x128xf32> to vector<16x128xf32>
    %41 = arith.addf %38, %40 : vector<16x128xf32>
    %42 = arith.addf %41, %1 : vector<16x128xf32>
    %c0_29 = arith.constant 0 : index
    %c0_30 = arith.constant 0 : index
    %43 = vector.load %arg11[%c0_29, %c0_30] : memref<1x128xf32, #tpu.memory_space<vmem>>, vector<1x128xf32>
    %c0_31 = arith.constant 0 : index
    %c0_32 = arith.constant 0 : index
    %44 = vector.load %arg12[%c0_31, %c0_32] : memref<1x128xf32, #tpu.memory_space<vmem>>, vector<1x128xf32>
    %cst_33 = arith.constant dense<0.000000e+00> : vector<16xf32>
    %45 = vector.multi_reduction <add>, %42, %cst_33 [1] : vector<16x128xf32> to vector<16xf32>
    %46 = vector.shape_cast %45 : vector<16xf32> to vector<16x1xf32>
    %cst_34 = arith.constant 1.280000e+02 : f32
    %47 = vector.broadcast %cst_34 : f32 to vector<16x1xf32>
    %48 = arith.divf %46, %47 : vector<16x1xf32>
    %49 = vector.broadcast %48 : vector<16x1xf32> to vector<16x128xf32>
    %50 = arith.subf %42, %49 : vector<16x128xf32>
    %51 = arith.mulf %50, %50 : vector<16x128xf32>
    %cst_35 = arith.constant dense<0.000000e+00> : vector<16xf32>
    %52 = vector.multi_reduction <add>, %51, %cst_35 [1] : vector<16x128xf32> to vector<16xf32>
    %53 = vector.shape_cast %52 : vector<16xf32> to vector<16x1xf32>
    %cst_36 = arith.constant 1.280000e+02 : f32
    %54 = vector.broadcast %cst_36 : f32 to vector<16x1xf32>
    %55 = arith.divf %53, %54 : vector<16x1xf32>
    %cst_37 = arith.constant 9.99999974E-6 : f32
    %56 = vector.broadcast %cst_37 : f32 to vector<16x1xf32>
    %57 = arith.addf %55, %56 : vector<16x1xf32>
    %58 = math.rsqrt %57 : vector<16x1xf32>
    %59 = vector.broadcast %58 : vector<16x1xf32> to vector<16x128xf32>
    %60 = arith.mulf %50, %59 : vector<16x128xf32>
    %61 = vector.broadcast %43 : vector<1x128xf32> to vector<16x128xf32>
    %62 = arith.mulf %60, %61 : vector<16x128xf32>
    %63 = vector.broadcast %44 : vector<1x128xf32> to vector<16x128xf32>
    %64 = arith.addf %62, %63 : vector<16x128xf32>
    %c0_38 = arith.constant 0 : index
    %c0_39 = arith.constant 0 : index
    %65 = vector.load %arg13[%c0_38, %c0_39] : memref<128x512xf32, #tpu.memory_space<vmem>>, vector<128x512xf32>
    %cst_40 = arith.constant dense<0.000000e+00> : vector<16x512xf32>
    %66 = tpu.matmul %64, %65, %cst_40 {dimension_numbers = #tpu.dot_dimension_numbers<[1], [0], [0], [1], [0, 0, 1, 1], [], []>} : vector<16x128xf32>, vector<128x512xf32>, vector<16x512xf32> -> vector<16x512xf32>
    %c0_41 = arith.constant 0 : index
    %c0_42 = arith.constant 0 : index
    %67 = vector.load %arg14[%c0_41, %c0_42] : memref<1x512xf32, #tpu.memory_space<vmem>>, vector<1x512xf32>
    %68 = vector.broadcast %67 : vector<1x512xf32> to vector<16x512xf32>
    %69 = arith.addf %66, %68 : vector<16x512xf32>
    %cst_43 = arith.constant 0.000000e+00 : f32
    %70 = vector.broadcast %cst_43 : f32 to vector<16x512xf32>
    %71 = arith.cmpf oge, %69, %70 : vector<16x512xf32>
    %cst_44 = arith.constant 2.000000e-02 : f32
    %72 = vector.broadcast %cst_44 : f32 to vector<16x512xf32>
    %73 = arith.mulf %72, %69 : vector<16x512xf32>
    %74 = arith.select %71, %69, %73 : vector<16x512xi1>, vector<16x512xf32>
    %c0_45 = arith.constant 0 : index
    %c0_46 = arith.constant 0 : index
    %75 = vector.load %arg15[%c0_45, %c0_46] : memref<512x128xf32, #tpu.memory_space<vmem>>, vector<512x128xf32>
    %cst_47 = arith.constant dense<0.000000e+00> : vector<16x128xf32>
    %76 = tpu.matmul %74, %75, %cst_47 {dimension_numbers = #tpu.dot_dimension_numbers<[1], [0], [0], [1], [0, 0, 1, 1], [], []>} : vector<16x512xf32>, vector<512x128xf32>, vector<16x128xf32> -> vector<16x128xf32>
    %c0_48 = arith.constant 0 : index
    %c0_49 = arith.constant 0 : index
    %77 = vector.load %arg16[%c0_48, %c0_49] : memref<1x128xf32, #tpu.memory_space<vmem>>, vector<1x128xf32>
    %78 = vector.broadcast %77 : vector<1x128xf32> to vector<16x128xf32>
    %79 = arith.addf %76, %78 : vector<16x128xf32>
    %cst_50 = arith.constant 0.000000e+00 : f32
    %80 = vector.broadcast %cst_50 : f32 to vector<16x128xf32>
    %81 = arith.cmpf oge, %79, %80 : vector<16x128xf32>
    %cst_51 = arith.constant 2.000000e-02 : f32
    %82 = vector.broadcast %cst_51 : f32 to vector<16x128xf32>
    %83 = arith.mulf %82, %79 : vector<16x128xf32>
    %84 = arith.select %81, %79, %83 : vector<16x128xi1>, vector<16x128xf32>
    %85 = arith.addf %84, %64 : vector<16x128xf32>
    %c0_52 = arith.constant 0 : index
    %c0_53 = arith.constant 0 : index
    %86 = vector.load %arg17[%c0_52, %c0_53] : memref<1x128xf32, #tpu.memory_space<vmem>>, vector<1x128xf32>
    %c0_54 = arith.constant 0 : index
    %c0_55 = arith.constant 0 : index
    %87 = vector.load %arg18[%c0_54, %c0_55] : memref<1x128xf32, #tpu.memory_space<vmem>>, vector<1x128xf32>
    %cst_56 = arith.constant dense<0.000000e+00> : vector<16xf32>
    %88 = vector.multi_reduction <add>, %85, %cst_56 [1] : vector<16x128xf32> to vector<16xf32>
    %89 = vector.shape_cast %88 : vector<16xf32> to vector<16x1xf32>
    %cst_57 = arith.constant 1.280000e+02 : f32
    %90 = vector.broadcast %cst_57 : f32 to vector<16x1xf32>
    %91 = arith.divf %89, %90 : vector<16x1xf32>
    %92 = vector.broadcast %91 : vector<16x1xf32> to vector<16x128xf32>
    %93 = arith.subf %85, %92 : vector<16x128xf32>
    %94 = arith.mulf %93, %93 : vector<16x128xf32>
    %cst_58 = arith.constant dense<0.000000e+00> : vector<16xf32>
    %95 = vector.multi_reduction <add>, %94, %cst_58 [1] : vector<16x128xf32> to vector<16xf32>
    %96 = vector.shape_cast %95 : vector<16xf32> to vector<16x1xf32>
    %cst_59 = arith.constant 1.280000e+02 : f32
    %97 = vector.broadcast %cst_59 : f32 to vector<16x1xf32>
    %98 = arith.divf %96, %97 : vector<16x1xf32>
    %cst_60 = arith.constant 9.99999974E-6 : f32
    %99 = vector.broadcast %cst_60 : f32 to vector<16x1xf32>
    %100 = arith.addf %98, %99 : vector<16x1xf32>
    %101 = math.rsqrt %100 : vector<16x1xf32>
    %102 = vector.broadcast %101 : vector<16x1xf32> to vector<16x128xf32>
    %103 = arith.mulf %93, %102 : vector<16x128xf32>
    %104 = vector.broadcast %86 : vector<1x128xf32> to vector<16x128xf32>
    %105 = arith.mulf %103, %104 : vector<16x128xf32>
    %106 = vector.broadcast %87 : vector<1x128xf32> to vector<16x128xf32>
    %107 = arith.addf %105, %106 : vector<16x128xf32>
    %108 = vector.shape_cast %107 : vector<16x128xf32> to vector<2x8x128xf32>
    %c0_61 = arith.constant 0 : index
    %c0_62 = arith.constant 0 : index
    %c0_63 = arith.constant 0 : index
    %109 = vector.load %arg19[%c0_61, %c0_62, %c0_63] : memref<2x8x128xf32, #tpu.memory_space<vmem>>, vector<2x8x128xf32>
    tpu.vector_store %arg19[%c0_61, %c0_62, %c0_63], %108 {strides = array<i32>} : memref<2x8x128xf32, #tpu.memory_space<vmem>>, vector<2x8x128xf32>,
    return
  }
  func.func @transform_0(%arg0: i32) -> (i32, i32, i32) {
    %c0_i32 = arith.constant 0 : i32
    %c0_i32_0 = arith.constant 0 : i32
    %c0_i32_1 = arith.constant 0 : i32
    return %arg0, %c0_i32, %c0_i32_0 : i32, i32, i32
  }
  func.func @transform_1(%arg0: i32) -> (i32, i32, i32) {
    %c0_i32 = arith.constant 0 : i32
    %c0_i32_0 = arith.constant 0 : i32
    %c0_i32_1 = arith.constant 0 : i32
    return %arg0, %c0_i32, %c0_i32_0 : i32, i32, i32
  }
  func.func @transform_2(%arg0: i32) -> (i32, i32) {
    %c0_i32 = arith.constant 0 : i32
    %c0_i32_0 = arith.constant 0 : i32
    %c0_i32_1 = arith.constant 0 : i32
    return %c0_i32, %c0_i32_0 : i32, i32
  }
  func.func @transform_3(%arg0: i32) -> (i32, i32) {
    %c0_i32 = arith.constant 0 : i32
    %c0_i32_0 = arith.constant 0 : i32
    %c0_i32_1 = arith.constant 0 : i32
    return %c0_i32, %c0_i32_0 : i32, i32
  }
  func.func @transform_4(%arg0: i32) -> (i32, i32) {
    %c0_i32 = arith.constant 0 : i32
    %c0_i32_0 = arith.constant 0 : i32
    %c0_i32_1 = arith.constant 0 : i32
    return %c0_i32, %c0_i32_0 : i32, i32
  }
  func.func @transform_5(%arg0: i32) -> (i32, i32) {
    %c0_i32 = arith.constant 0 : i32
    %c0_i32_0 = arith.constant 0 : i32
    %c0_i32_1 = arith.constant 0 : i32
    return %c0_i32, %c0_i32_0 : i32, i32
  }
  func.func @transform_6(%arg0: i32) -> (i32, i32) {
    %c0_i32 = arith.constant 0 : i32
    %c0_i32_0 = arith.constant 0 : i32
    %c0_i32_1 = arith.constant 0 : i32
    return %c0_i32, %c0_i32_0 : i32, i32
  }
  func.func @transform_7(%arg0: i32) -> (i32, i32) {
    %c0_i32 = arith.constant 0 : i32
    %c0_i32_0 = arith.constant 0 : i32
    %c0_i32_1 = arith.constant 0 : i32
    return %c0_i32, %c0_i32_0 : i32, i32
  }
  func.func @transform_8(%arg0: i32) -> (i32, i32) {
    %c0_i32 = arith.constant 0 : i32
    %c0_i32_0 = arith.constant 0 : i32
    %c0_i32_1 = arith.constant 0 : i32
    return %c0_i32, %c0_i32_0 : i32, i32
  }
  func.func @transform_9(%arg0: i32) -> (i32, i32) {
    %c0_i32 = arith.constant 0 : i32
    %c0_i32_0 = arith.constant 0 : i32
    %c0_i32_1 = arith.constant 0 : i32
    return %c0_i32, %c0_i32_0 : i32, i32
  }
  func.func @transform_10(%arg0: i32) -> (i32, i32) {
    %c0_i32 = arith.constant 0 : i32
    %c0_i32_0 = arith.constant 0 : i32
    %c0_i32_1 = arith.constant 0 : i32
    return %c0_i32, %c0_i32_0 : i32, i32
  }
  func.func @transform_11(%arg0: i32) -> (i32, i32) {
    %c0_i32 = arith.constant 0 : i32
    %c0_i32_0 = arith.constant 0 : i32
    %c0_i32_1 = arith.constant 0 : i32
    return %c0_i32, %c0_i32_0 : i32, i32
  }
  func.func @transform_12(%arg0: i32) -> (i32, i32) {
    %c0_i32 = arith.constant 0 : i32
    %c0_i32_0 = arith.constant 0 : i32
    %c0_i32_1 = arith.constant 0 : i32
    return %c0_i32, %c0_i32_0 : i32, i32
  }
  func.func @transform_13(%arg0: i32) -> (i32, i32) {
    %c0_i32 = arith.constant 0 : i32
    %c0_i32_0 = arith.constant 0 : i32
    %c0_i32_1 = arith.constant 0 : i32
    return %c0_i32, %c0_i32_0 : i32, i32
  }
  func.func @transform_14(%arg0: i32) -> (i32, i32) {
    %c0_i32 = arith.constant 0 : i32
    %c0_i32_0 = arith.constant 0 : i32
    %c0_i32_1 = arith.constant 0 : i32
    return %c0_i32, %c0_i32_0 : i32, i32
  }
  func.func @transform_15(%arg0: i32) -> (i32, i32) {
    %c0_i32 = arith.constant 0 : i32
    %c0_i32_0 = arith.constant 0 : i32
    %c0_i32_1 = arith.constant 0 : i32
    return %c0_i32, %c0_i32_0 : i32, i32
  }
  func.func @transform_16(%arg0: i32) -> (i32, i32) {
    %c0_i32 = arith.constant 0 : i32
    %c0_i32_0 = arith.constant 0 : i32
    %c0_i32_1 = arith.constant 0 : i32
    return %c0_i32, %c0_i32_0 : i32, i32
  }
  func.func @transform_17(%arg0: i32) -> (i32, i32) {
    %c0_i32 = arith.constant 0 : i32
    %c0_i32_0 = arith.constant 0 : i32
    %c0_i32_1 = arith.constant 0 : i32
    return %c0_i32, %c0_i32_0 : i32, i32
  }
  func.func @transform_18(%arg0: i32) -> (i32, i32, i32) {
    %c0_i32 = arith.constant 0 : i32
    %c0_i32_0 = arith.constant 0 : i32
    %c0_i32_1 = arith.constant 0 : i32
    return %arg0, %c0_i32, %c0_i32_0 : i32, i32, i32
  }
}

</mosaic_0001>

<llo_original>
// kernel: tpu_custom_call.1
$region0: #{tpu_custom_call.1}
  #allocation0 [shape = 'u32[]', space=smem, size = 0x4, offset = 0x4, fixed_abs, tag = 'smem constant byte address 0x4 - core index']
  #allocation1 [shape = 'u32[144,128]{1,0:T(1,128)}', space=vmem, size = 0x12000, scoped, tag = 'internal scratch']
  %s0 = inlined_call_operand.hbm [shape: f32[2,8,128], index: 0, kind: input, shape index: {}]
  %s1 = inlined_call_operand.hbm [shape: f32[2,8,128], index: 1, kind: input, shape index: {}]
  %s2 = inlined_call_operand.hbm [shape: f32[128,128], index: 2, kind: input, shape index: {}]
  %s3 = inlined_call_operand.hbm [shape: f32[128,128], index: 3, kind: input, shape index: {}]
  %s4 = inlined_call_operand.hbm [shape: f32[128,128], index: 4, kind: input, shape index: {}]
  %s5 = inlined_call_operand.vmem [shape: f32[1,128], index: 5, kind: input, shape index: {}]
  %s6 = inlined_call_operand.vmem [shape: f32[1,128], index: 6, kind: input, shape index: {}]
  %s7 = inlined_call_operand.vmem [shape: f32[1,128], index: 7, kind: input, shape index: {}]
  %s8 = inlined_call_operand.hbm [shape: f32[128,128], index: 8, kind: input, shape index: {}]
  %s9 = inlined_call_operand.vmem [shape: f32[1,128], index: 9, kind: input, shape index: {}]
  %s10 = inlined_call_operand.vmem [shape: f32[1,128], index: 10, kind: input, shape index: {}]
  %s11 = inlined_call_operand.vmem [shape: f32[1,128], index: 11, kind: input, shape index: {}]
  %s12 = inlined_call_operand.hbm [shape: f32[128,512], index: 12, kind: input, shape index: {}]
  %s13 = inlined_call_operand.vmem [shape: f32[1,512], index: 13, kind: input, shape index: {}]
  %s14 = inlined_call_operand.hbm [shape: f32[512,128], index: 14, kind: input, shape index: {}]
  %s15 = inlined_call_operand.vmem [shape: f32[1,128], index: 15, kind: input, shape index: {}]
  %s16 = inlined_call_operand.vmem [shape: f32[1,128], index: 16, kind: input, shape index: {}]
  %s17 = inlined_call_operand.vmem [shape: f32[1,128], index: 17, kind: input, shape index: {}]
  %s18 = inlined_call_operand.hbm [shape: f32[2,8,128], index: 18, kind: output, shape index: {}]
  %s19 = sld [smem:[#allocation0]]
  $region114: #{tpu_custom_call.1} parent=0
    _
  %s21 = ssub.s32 1, %s19
  %s22 = scalar_select 0, %s21, %s19
  $region1: #{tpu_custom_call.1} parent=0
    #allocation2 [shape = 'u8[8192]{0}', space=vmem, size = 0x2000, scoped, tag = 'input window, operand 0, single buffered']
    #allocation3 [shape = 's32[1]{0}', space=sflag, size = 0x4, scoped, tag = 'scoped memory for tpu_custom_call.1']
    #allocation4 [shape = 's32[1]{0}', space=sflag, size = 0x4, scoped, tag = 'scoped memory for tpu_custom_call.1']
    #allocation5 [shape = 'u8[8192]{0}', space=vmem, size = 0x2000, scoped, tag = 'input window, operand 1, single buffered']
    #allocation6 [shape = 's32[1]{0}', space=sflag, size = 0x4, scoped, tag = 'scoped memory for tpu_custom_call.1']
    #allocation7 [shape = 'u8[65536]{0}', space=vmem, size = 0x10000, scoped, tag = 'input window, operand 2, single buffered']
    #allocation8 [shape = 'u8[65536]{0}', space=vmem, size = 0x10000, scoped, tag = 'input window, operand 3, single buffered']
    #allocation9 [shape = 's32[1]{0}', space=sflag, size = 0x4, scoped, tag = 'scoped memory for tpu_custom_call.1']
    #allocation10 [shape = 'u8[65536]{0}', space=vmem, size = 0x10000, scoped, tag = 'input window, operand 4, single buffered']
    #allocation11 [shape = 'u8[65536]{0}', space=vmem, size = 0x10000, scoped, tag = 'input window, operand 8, single buffered']
    #allocation12 [shape = 's32[1]{0}', space=sflag, size = 0x4, scoped, tag = 'scoped memory for tpu_custom_call.1']
    #allocation13 [shape = 'u8[262144]{0}', space=vmem, size = 0x40000, scoped, tag = 'input window, operand 12, single buffered']
    #allocation14 [shape = 'u8[262144]{0}', space=vmem, size = 0x40000, scoped, tag = 'input window, operand 14, single buffered']
    #allocation15 [shape = 's32[1]{0}', space=sflag, size = 0x4, scoped, tag = 'scoped memory for tpu_custom_call.1']
    #allocation16 [shape = 'u8[8192]{0}', space=vmem, size = 0x2000, scoped, tag = 'output window, operand 0, single buffered']
    %23 = vsyncpa [#allocation3], 0
    %24 = vsyncpa [#allocation6], 0
    %25 = vsyncpa [#allocation9], 0
    %26 = vsyncpa [#allocation12], 0
    %27 = vsyncpa [#allocation15], 0
    %28 = vsyncpa [#allocation4], 0
    // Predicated region
    $region2: #{tpu_custom_call.1} parent=1 // pred_check
      _
    $region3: #{tpu_custom_call.1} parent=1 // pred_check_branch
      %30 = sbr.rel (0) target = $region5
    $region4: #{tpu_custom_call.1} parent=1 // pred_region
      %s32 = ssub.s32 256, 256
      %33 = vsyncadd [#allocation3], %s32
      %s34 = sshll.u32 [#allocation2], 4
      %s35 = int_to_ptr.vmem [resolvable:$true] %s34
      %40 = dma.hbm_to_vmem [thread:$0]  %s0, 256, %s35, [#allocation3], 128, 128, 8
    $region5: #{tpu_custom_call.1} parent=1 // pred_fallthru
      _
    // Predicated region
    $region6: #{tpu_custom_call.1} parent=1 // pred_check
      _
    $region7: #{tpu_custom_call.1} parent=1 // pred_check_branch
      %42 = sbr.rel (0) target = $region9
    $region8: #{tpu_custom_call.1} parent=1 // pred_region
      %s44 = ssub.s32 256, 256
      %45 = vsyncadd [#allocation6], %s44
      %s46 = sshll.u32 [#allocation5], 4
      %s47 = int_to_ptr.vmem [resolvable:$true] %s46
      %52 = dma.hbm_to_vmem [thread:$0]  %s1, 256, %s47, [#allocation6], 128, 128, 8
    $region9: #{tpu_custom_call.1} parent=1 // pred_fallthru
      _
    // Predicated region
    $region10: #{tpu_custom_call.1} parent=1 // pred_check
      _
    $region11: #{tpu_custom_call.1} parent=1 // pred_check_branch
      %54 = sbr.rel (0) target = $region13
    $region12: #{tpu_custom_call.1} parent=1 // pred_region
      %s56 = ssub.s32 2048, 2048
      %57 = vsyncadd [#allocation6], %s56
      %s58 = sshll.u32 [#allocation7], 4
      %s59 = int_to_ptr.vmem [resolvable:$true] %s58
      %64 = dma.hbm_to_vmem [thread:$0]  %s2, 2048, %s59, [#allocation6], 128, 128, 8
    $region13: #{tpu_custom_call.1} parent=1 // pred_fallthru
      _
    // Predicated region
    $region14: #{tpu_custom_call.1} parent=1 // pred_check
      _
    $region15: #{tpu_custom_call.1} parent=1 // pred_check_branch
      %66 = sbr.rel (0) target = $region17
    $region16: #{tpu_custom_call.1} parent=1 // pred_region
      %s68 = ssub.s32 2048, 2048
      %69 = vsyncadd [#allocation9], %s68
      %s70 = sshll.u32 [#allocation8], 4
      %s71 = int_to_ptr.vmem [resolvable:$true] %s70
      %76 = dma.hbm_to_vmem [thread:$0]  %s3, 2048, %s71, [#allocation9], 128, 128, 8
    $region17: #{tpu_custom_call.1} parent=1 // pred_fallthru
      _
    // Predicated region
    $region18: #{tpu_custom_call.1} parent=1 // pred_check
      _
    $region19: #{tpu_custom_call.1} parent=1 // pred_check_branch
      %78 = sbr.rel (0) target = $region21
    $region20: #{tpu_custom_call.1} parent=1 // pred_region
      %s80 = ssub.s32 2048, 2048
      %81 = vsyncadd [#allocation9], %s80
      %s82 = sshll.u32 [#allocation10], 4
      %s83 = int_to_ptr.vmem [resolvable:$true] %s82
      %88 = dma.hbm_to_vmem [thread:$0]  %s4, 2048, %s83, [#allocation9], 128, 128, 8
    $region21: #{tpu_custom_call.1} parent=1 // pred_fallthru
      _
    // Predicated region
    $region22: #{tpu_custom_call.1} parent=1 // pred_check
      _
    $region23: #{tpu_custom_call.1} parent=1 // pred_check_branch
      %90 = sbr.rel (0) target = $region25
    $region24: #{tpu_custom_call.1} parent=1 // pred_region
      _
    $region25: #{tpu_custom_call.1} parent=1 // pred_fallthru
      _
    // Predicated region
    $region26: #{tpu_custom_call.1} parent=1 // pred_check
      _
    $region27: #{tpu_custom_call.1} parent=1 // pred_check_branch
      %92 = sbr.rel (0) target = $region29
    $region28: #{tpu_custom_call.1} parent=1 // pred_region
      _
    $region29: #{tpu_custom_call.1} parent=1 // pred_fallthru
      _
    // Predicated region
    $region30: #{tpu_custom_call.1} parent=1 // pred_check
      _
    $region31: #{tpu_custom_call.1} parent=1 // pred_check_branch
      %94 = sbr.rel (0) target = $region33
    $region32: #{tpu_custom_call.1} parent=1 // pred_region
      _
    $region33: #{tpu_custom_call.1} parent=1 // pred_fallthru
      _
    // Predicated region
    $region34: #{tpu_custom_call.1} parent=1 // pred_check
      _
    $region35: #{tpu_custom_call.1} parent=1 // pred_check_branch
      %96 = sbr.rel (0) target = $region37
    $region36: #{tpu_custom_call.1} parent=1 // pred_region
      %s98 = ssub.s32 2048, 2048
      %99 = vsyncadd [#allocation12], %s98
      %s100 = sshll.u32 [#allocation11], 4
      %s101 = int_to_ptr.vmem [resolvable:$true] %s100
      %106 = dma.hbm_to_vmem [thread:$0]  %s8, 2048, %s101, [#allocation12], 128, 128, 8
    $region37: #{tpu_custom_call.1} parent=1 // pred_fallthru
      _
    // Predicated region
    $region38: #{tpu_custom_call.1} parent=1 // pred_check
      _
    $region39: #{tpu_custom_call.1} parent=1 // pred_check_branch
      %108 = sbr.rel (0) target = $region41
    $region40: #{tpu_custom_call.1} parent=1 // pred_region
      _
    $region41: #{tpu_custom_call.1} parent=1 // pred_fallthru
      _
    // Predicated region
    $region42: #{tpu_custom_call.1} parent=1 // pred_check
      _
    $region43: #{tpu_custom_call.1} parent=1 // pred_check_branch
      %110 = sbr.rel (0) target = $region45
    $region44: #{tpu_custom_call.1} parent=1 // pred_region
      _
    $region45: #{tpu_custom_call.1} parent=1 // pred_fallthru
      _
    // Predicated region
    $region46: #{tpu_custom_call.1} parent=1 // pred_check
      _
    $region47: #{tpu_custom_call.1} parent=1 // pred_check_branch
      %112 = sbr.rel (0) target = $region49
    $region48: #{tpu_custom_call.1} parent=1 // pred_region
      _
    $region49: #{tpu_custom_call.1} parent=1 // pred_fallthru
      _
    // Predicated region
    $region50: #{tpu_custom_call.1} parent=1 // pred_check
      _
    $region51: #{tpu_custom_call.1} parent=1 // pred_check_branch
      %114 = sbr.rel (0) target = $region53
    $region52: #{tpu_custom_call.1} parent=1 // pred_region
      %s116 = ssub.s32 8192, 8192
      %117 = vsyncadd [#allocation12], %s116
      %s118 = sshll.u32 [#allocation13], 4
      %s119 = int_to_ptr.vmem [resolvable:$true] %s118
      %124 = dma.hbm_to_vmem [thread:$0]  %s12, 8192, %s119, [#allocation12], 512, 512, 32
    $region53: #{tpu_custom_call.1} parent=1 // pred_fallthru
      _
    // Predicated region
    $region54: #{tpu_custom_call.1} parent=1 // pred_check
      _
    $region55: #{tpu_custom_call.1} parent=1 // pred_check_branch
      %126 = sbr.rel (0) target = $region57
    $region56: #{tpu_custom_call.1} parent=1 // pred_region
      _
    $region57: #{tpu_custom_call.1} parent=1 // pred_fallthru
      _
    // Predicated region
    $region58: #{tpu_custom_call.1} parent=1 // pred_check
      _
    $region59: #{tpu_custom_call.1} parent=1 // pred_check_branch
      %128 = sbr.rel (0) target = $region61
    $region60: #{tpu_custom_call.1} parent=1 // pred_region
      %s130 = ssub.s32 8192, 8192
      %131 = vsyncadd [#allocation15], %s130
      %s132 = sshll.u32 [#allocation14], 4
      %s133 = int_to_ptr.vmem [resolvable:$true] %s132
      %138 = dma.hbm_to_vmem [thread:$0]  %s14, 8192, %s133, [#allocation15], 128, 128, 8
    $region61: #{tpu_custom_call.1} parent=1 // pred_fallthru
      _
    // Predicated region
    $region62: #{tpu_custom_call.1} parent=1 // pred_check
      _
    $region63: #{tpu_custom_call.1} parent=1 // pred_check_branch
      %140 = sbr.rel (0) target = $region65
    $region64: #{tpu_custom_call.1} parent=1 // pred_region
      _
    $region65: #{tpu_custom_call.1} parent=1 // pred_fallthru
      _
    // Predicated region
    $region66: #{tpu_custom_call.1} parent=1 // pred_check
      _
    $region67: #{tpu_custom_call.1} parent=1 // pred_check_branch
      %142 = sbr.rel (0) target = $region69
    $region68: #{tpu_custom_call.1} parent=1 // pred_region
      _
    $region69: #{tpu_custom_call.1} parent=1 // pred_fallthru
      _
    // Predicated region
    $region70: #{tpu_custom_call.1} parent=1 // pred_check
      _
    $region71: #{tpu_custom_call.1} parent=1 // pred_check_branch
      %144 = sbr.rel (0) target = $region73
    $region72: #{tpu_custom_call.1} parent=1 // pred_region
      _
    $region73: #{tpu_custom_call.1} parent=1 // pred_fallthru
      _
    // Predicated region
    $region74: #{tpu_custom_call.1} parent=1 // pred_check
      _
    $region75: #{tpu_custom_call.1} parent=1 // pred_check_branch
      %146 = sbr.rel (0) target = $region77
    $region76: #{tpu_custom_call.1} parent=1 // pred_region
      %147 = dma.done [#allocation3], 256
    $region77: #{tpu_custom_call.1} parent=1 // pred_fallthru
      _
    // Predicated region
    $region78: #{tpu_custom_call.1} parent=1 // pred_check
      _
    $region79: #{tpu_custom_call.1} parent=1 // pred_check_branch
      %149 = sbr.rel (0) target = $region81
    $region80: #{tpu_custom_call.1} parent=1 // pred_region
      %150 = dma.done [#allocation6], 256
    $region81: #{tpu_custom_call.1} parent=1 // pred_fallthru
      _
    // Predicated region
    $region82: #{tpu_custom_call.1} parent=1 // pred_check
      _
    $region83: #{tpu_custom_call.1} parent=1 // pred_check_branch
      %152 = sbr.rel (0) target = $region85
    $region84: #{tpu_custom_call.1} parent=1 // pred_region
      %153 = dma.done [#allocation6], 2048
    $region85: #{tpu_custom_call.1} parent=1 // pred_fallthru
      _
    // Predicated region
    $region86: #{tpu_custom_call.1} parent=1 // pred_check
      _
    $region87: #{tpu_custom_call.1} parent=1 // pred_check_branch
      %155 = sbr.rel (0) target = $region89
    $region88: #{tpu_custom_call.1} parent=1 // pred_region
      %156 = dma.done [#allocation9], 2048
    $region89: #{tpu_custom_call.1} parent=1 // pred_fallthru
      _
    // Predicated region
    $region90: #{tpu_custom_call.1} parent=1 // pred_check
      _
    $region91: #{tpu_custom_call.1} parent=1 // pred_check_branch
      %158 = sbr.rel (0) target = $region93
    $region92: #{tpu_custom_call.1} parent=1 // pred_region
      %159 = dma.done [#allocation9], 2048
    $region93: #{tpu_custom_call.1} parent=1 // pred_fallthru
      _
    // Predicated region
    $region94: #{tpu_custom_call.1} parent=1 // pred_check
      _
    $region95: #{tpu_custom_call.1} parent=1 // pred_check_branch
      %161 = sbr.rel (0) target = $region97
    $region96: #{tpu_custom_call.1} parent=1 // pred_region
      %162 = dma.done [#allocation12], 2048
    $region97: #{tpu_custom_call.1} parent=1 // pred_fallthru
      _
    // Predicated region
    $region98: #{tpu_custom_call.1} parent=1 // pred_check
      _
    $region99: #{tpu_custom_call.1} parent=1 // pred_check_branch
      %164 = sbr.rel (0) target = $region101
    $region100: #{tpu_custom_call.1} parent=1 // pred_region
      %165 = dma.done [#allocation12], 8192
    $region101: #{tpu_custom_call.1} parent=1 // pred_fallthru
      _
    // Predicated region
    $region102: #{tpu_custom_call.1} parent=1 // pred_check
      _
    $region103: #{tpu_custom_call.1} parent=1 // pred_check_branch
      %167 = sbr.rel (0) target = $region105
    $region104: #{tpu_custom_call.1} parent=1 // pred_region
      %168 = dma.done [#allocation15], 8192
    $region105: #{tpu_custom_call.1} parent=1 // pred_fallthru
      _
    %v169 = vld [vmem:[#allocation2] sm:$0xff]
    %v170 = vld [vmem:[#allocation2 + $0x8] sm:$0xff]
    %v171 = vld [vmem:[#allocation5] sm:$0xff]
    %v172 = vld [vmem:[#allocation5 + $0x8] sm:$0xff]
    %v173 = vld [vmem:[#allocation7] sm:$0xff]
    %v174 = vld [vmem:[#allocation7 + $0x8] sm:$0xff]
    %v175 = vld [vmem:[#allocation7 + $0x10] sm:$0xff]
    %v176 = vld [vmem:[#allocation7 + $0x18] sm:$0xff]
    %v177 = vld [vmem:[#allocation7 + $0x20] sm:$0xff]
    %v178 = vld [vmem:[#allocation7 + $0x28] sm:$0xff]
    %v179 = vld [vmem:[#allocation7 + $0x30] sm:$0xff]
    %v180 = vld [vmem:[#allocation7 + $0x38] sm:$0xff]
    %v181 = vld [vmem:[#allocation7 + $0x40] sm:$0xff]
    %v182 = vld [vmem:[#allocation7 + $0x48] sm:$0xff]
    %v183 = vld [vmem:[#allocation7 + $0x50] sm:$0xff]
    %v184 = vld [vmem:[#allocation7 + $0x58] sm:$0xff]
    %v185 = vld [vmem:[#allocation7 + $0x60] sm:$0xff]
    %v186 = vld [vmem:[#allocation7 + $0x68] sm:$0xff]
    %v187 = vld [vmem:[#allocation7 + $0x70] sm:$0xff]
    %v188 = vld [vmem:[#allocation7 + $0x78] sm:$0xff]
    %v189 = vld [vmem:[%s5] sm:$0x1]
    %v191 = vlaneseq
    %v192 = vshrl.u32 %v191, 7
    %v193 = vsub.s32 0, %v192
    %v194 = vrot.slane %v189, %v193
    %196 = vmatprep.subr.mxu0 0.0
    %197 = vmatpush1.msra.mxu0 %v173
    %198 = vmatprep.subr.mxu0 0.0
    %199 = vmatpush1.msra.mxu0 %v174
    %200 = vmatprep.subr.mxu0 0.0
    %201 = vmatpush1.msra.mxu0 %v175
    %202 = vmatprep.subr.mxu0 0.0
    %203 = vmatpush1.msra.mxu0 %v176
    %204 = vmatprep.subr.mxu0 0.0
    %205 = vmatpush1.msra.mxu0 %v177
    %206 = vmatprep.subr.mxu0 0.0
    %207 = vmatpush1.msra.mxu0 %v178
    %208 = vmatprep.subr.mxu0 0.0
    %209 = vmatpush1.msra.mxu0 %v179
    %210 = vmatprep.subr.mxu0 0.0
    %211 = vmatpush1.msra.mxu0 %v180
    %212 = vmatprep.subr.mxu0 0.0
    %213 = vmatpush1.msra.mxu0 %v181
    %214 = vmatprep.subr.mxu0 0.0
    %215 = vmatpush1.msra.mxu0 %v182
    %216 = vmatprep.subr.mxu0 0.0
    %217 = vmatpush1.msra.mxu0 %v183
    %218 = vmatprep.subr.mxu0 0.0
    %219 = vmatpush1.msra.mxu0 %v184
    %220 = vmatprep.subr.mxu0 0.0
    %221 = vmatpush1.msra.mxu0 %v185
    %222 = vmatprep.subr.mxu0 0.0
    %223 = vmatpush1.msra.mxu0 %v186
    %224 = vmatprep.subr.mxu0 0.0
    %225 = vmatpush1.msra.mxu0 %v187
    %226 = vmatprep.subr.mxu0 0.0
    %227 = vmatpush1.msra.mxu0 %v188
    %228 = vmatprep.subr.mxu0 0.0
    %229 = vmatpush1.msra.mxu0 0.0
    %230 = vmatprep.subr.mxu0 0.0
    %231 = vmatpush1.msra.mxu0 0.0
    %232 = vmatprep.subr.mxu0 0.0
    %233 = vmatpush1.msra.mxu0 0.0
    %234 = vmatprep.subr.mxu0 0.0
    %235 = vmatpush1.msra.mxu0 0.0
    %236 = vmatprep.subr.mxu0 0.0
    %237 = vmatpush1.msra.mxu0 0.0
    %238 = vmatprep.subr.mxu0 0.0
    %239 = vmatpush1.msra.mxu0 0.0
    %240 = vmatprep.subr.mxu0 0.0
    %241 = vmatpush1.msra.mxu0 0.0
    %242 = vmatprep.subr.mxu0 0.0
    %243 = vmatpush1.msra.mxu0 0.0
    %244 = vmatprep.subr.mxu0 0.0
    %245 = vmatpush1.msra.mxu0 0.0
    %246 = vmatprep.subr.mxu0 0.0
    %247 = vmatpush1.msra.mxu0 0.0
    %248 = vmatprep.subr.mxu0 0.0
    %249 = vmatpush1.msra.mxu0 0.0
    %250 = vmatprep.subr.mxu0 0.0
    %251 = vmatpush1.msra.mxu0 0.0
    %252 = vmatprep.subr.mxu0 0.0
    %253 = vmatpush1.msra.mxu0 0.0
    %254 = vmatprep.subr.mxu0 0.0
    %255 = vmatpush1.msra.mxu0 0.0
    %256 = vmatprep.subr.mxu0 0.0
    %257 = vmatpush1.msra.mxu0 0.0
    %258 = vmatprep.subr.mxu0 0.0
    %259 = vmatpush1.msra.mxu0 0.0
    %260 = vmatprep.mubr.f32.mxu0 0.0
    %261 = vmatmul.mubr.f32.gmra.mrb[0].mxu0 %v169
    %v262 = vpop.f32.mrb[0].mxu0
    %v263 = vadd.f32 %v194, %v262
    %v264 = vpop.f32.mrb[0].mxu0
    %265 = vmatprep.mubr.f32.mxu0 0.0
    %266 = vmatmul.mubr.f32.gmra.mrb[0].mxu0 %v170
    %v267 = vpop.f32.mrb[0].mxu0
    %v268 = vadd.f32 %v194, %v267
    %v269 = vpop.f32.mrb[0].mxu0
    %270 = vdwg.mxu0
    %v271 = vmul.f32 %v263, 0.088388346
    %v272 = vmul.f32 %v268, 0.088388346
    %v273 = vld [vmem:[#allocation8] sm:$0xff]
    %v274 = vld [vmem:[#allocation8 + $0x8] sm:$0xff]
    %v275 = vld [vmem:[#allocation8 + $0x10] sm:$0xff]
    %v276 = vld [vmem:[#allocation8 + $0x18] sm:$0xff]
    %v277 = vld [vmem:[#allocation8 + $0x20] sm:$0xff]
    %v278 = vld [vmem:[#allocation8 + $0x28] sm:$0xff]
    %v279 = vld [vmem:[#allocation8 + $0x30] sm:$0xff]
    %v280 = vld [vmem:[#allocation8 + $0x38] sm:$0xff]
    %v281 = vld [vmem:[#allocation8 + $0x40] sm:$0xff]
    %v282 = vld [vmem:[#allocation8 + $0x48] sm:$0xff]
    %v283 = vld [vmem:[#allocation8 + $0x50] sm:$0xff]
    %v284 = vld [vmem:[#allocation8 + $0x58] sm:$0xff]
    %v285 = vld [vmem:[#allocation8 + $0x60] sm:$0xff]
    %v286 = vld [vmem:[#allocation8 + $0x68] sm:$0xff]
    %v287 = vld [vmem:[#allocation8 + $0x70] sm:$0xff]
    %v288 = vld [vmem:[#allocation8 + $0x78] sm:$0xff]
    %v289 = vld [vmem:[%s6] sm:$0x1]
    %v291 = vlaneseq
    %v292 = vshrl.u32 %v291, 7
    %v293 = vsub.s32 0, %v292
    %v294 = vrot.slane %v289, %v293
    %296 = vmatprep.subr.mxu0 0.0
    %297 = vmatpush1.msra.mxu0 %v273
    %298 = vmatprep.subr.mxu0 0.0
    %299 = vmatpush1.msra.mxu0 %v274
    %300 = vmatprep.subr.mxu0 0.0
    %301 = vmatpush1.msra.mxu0 %v275
    %302 = vmatprep.subr.mxu0 0.0
    %303 = vmatpush1.msra.mxu0 %v276
    %304 = vmatprep.subr.mxu0 0.0
    %305 = vmatpush1.msra.mxu0 %v277
    %306 = vmatprep.subr.mxu0 0.0
    %307 = vmatpush1.msra.mxu0 %v278
    %308 = vmatprep.subr.mxu0 0.0
    %309 = vmatpush1.msra.mxu0 %v279
    %310 = vmatprep.subr.mxu0 0.0
    %311 = vmatpush1.msra.mxu0 %v280
    %312 = vmatprep.subr.mxu0 0.0
    %313 = vmatpush1.msra.mxu0 %v281
    %314 = vmatprep.subr.mxu0 0.0
    %315 = vmatpush1.msra.mxu0 %v282
    %316 = vmatprep.subr.mxu0 0.0
    %317 = vmatpush1.msra.mxu0 %v283
    %318 = vmatprep.subr.mxu0 0.0
    %319 = vmatpush1.msra.mxu0 %v284
    %320 = vmatprep.subr.mxu0 0.0
    %321 = vmatpush1.msra.mxu0 %v285
    %322 = vmatprep.subr.mxu0 0.0
    %323 = vmatpush1.msra.mxu0 %v286
    %324 = vmatprep.subr.mxu0 0.0
    %325 = vmatpush1.msra.mxu0 %v287
    %326 = vmatprep.subr.mxu0 0.0
    %327 = vmatpush1.msra.mxu0 %v288
    %328 = vmatprep.subr.mxu0 0.0
    %329 = vmatpush1.msra.mxu0 0.0
    %330 = vmatprep.subr.mxu0 0.0
    %331 = vmatpush1.msra.mxu0 0.0
    %332 = vmatprep.subr.mxu0 0.0
    %333 = vmatpush1.msra.mxu0 0.0
    %334 = vmatprep.subr.mxu0 0.0
    %335 = vmatpush1.msra.mxu0 0.0
    %336 = vmatprep.subr.mxu0 0.0
    %337 = vmatpush1.msra.mxu0 0.0
    %338 = vmatprep.subr.mxu0 0.0
    %339 = vmatpush1.msra.mxu0 0.0
    %340 = vmatprep.subr.mxu0 0.0
    %341 = vmatpush1.msra.mxu0 0.0
    %342 = vmatprep.subr.mxu0 0.0
    %343 = vmatpush1.msra.mxu0 0.0
    %344 = vmatprep.subr.mxu0 0.0
    %345 = vmatpush1.msra.mxu0 0.0
    %346 = vmatprep.subr.mxu0 0.0
    %347 = vmatpush1.msra.mxu0 0.0
    %348 = vmatprep.subr.mxu0 0.0
    %349 = vmatpush1.msra.mxu0 0.0
    %350 = vmatprep.subr.mxu0 0.0
    %351 = vmatpush1.msra.mxu0 0.0
    %352 = vmatprep.subr.mxu0 0.0
    %353 = vmatpush1.msra.mxu0 0.0
    %354 = vmatprep.subr.mxu0 0.0
    %355 = vmatpush1.msra.mxu0 0.0
    %356 = vmatprep.subr.mxu0 0.0
    %357 = vmatpush1.msra.mxu0 0.0
    %358 = vmatprep.subr.mxu0 0.0
    %359 = vmatpush1.msra.mxu0 0.0
    %360 = vmatprep.mubr.f32.mxu0 0.0
    %361 = vmatmul.mubr.f32.gmra.mrb[0].mxu0 %v171
    %v362 = vpop.f32.mrb[0].mxu0
    %v363 = vadd.f32 %v294, %v362
    %v364 = vpop.f32.mrb[0].mxu0
    %365 = vmatprep.mubr.f32.mxu0 0.0
    %366 = vmatmul.mubr.f32.gmra.mrb[0].mxu0 %v172
    %v367 = vpop.f32.mrb[0].mxu0
    %v368 = vadd.f32 %v294, %v367
    %v369 = vpop.f32.mrb[0].mxu0
    %370 = vdwg.mxu0
    %v371 = vld [vmem:[#allocation10] sm:$0xff]
    %v372 = vld [vmem:[#allocation10 + $0x8] sm:$0xff]
    %v373 = vld [vmem:[#allocation10 + $0x10] sm:$0xff]
    %v374 = vld [vmem:[#allocation10 + $0x18] sm:$0xff]
    %v375 = vld [vmem:[#allocation10 + $0x20] sm:$0xff]
    %v376 = vld [vmem:[#allocation10 + $0x28] sm:$0xff]
    %v377 = vld [vmem:[#allocation10 + $0x30] sm:$0xff]
    %v378 = vld [vmem:[#allocation10 + $0x38] sm:$0xff]
    %v379 = vld [vmem:[#allocation10 + $0x40] sm:$0xff]
    %v380 = vld [vmem:[#allocation10 + $0x48] sm:$0xff]
    %v381 = vld [vmem:[#allocation10 + $0x50] sm:$0xff]
    %v382 = vld [vmem:[#allocation10 + $0x58] sm:$0xff]
    %v383 = vld [vmem:[#allocation10 + $0x60] sm:$0xff]
    %v384 = vld [vmem:[#allocation10 + $0x68] sm:$0xff]
    %v385 = vld [vmem:[#allocation10 + $0x70] sm:$0xff]
    %v386 = vld [vmem:[#allocation10 + $0x78] sm:$0xff]
    %v387 = vld [vmem:[%s7] sm:$0x1]
    %v389 = vlaneseq
    %v390 = vshrl.u32 %v389, 7
    %v391 = vsub.s32 0, %v390
    %v392 = vrot.slane %v387, %v391
    %394 = vmatprep.subr.mxu0 0.0
    %395 = vmatpush1.msra.mxu0 %v371
    %396 = vmatprep.subr.mxu0 0.0
    %397 = vmatpush1.msra.mxu0 %v372
    %398 = vmatprep.subr.mxu0 0.0
    %399 = vmatpush1.msra.mxu0 %v373
    %400 = vmatprep.subr.mxu0 0.0
    %401 = vmatpush1.msra.mxu0 %v374
    %402 = vmatprep.subr.mxu0 0.0
    %403 = vmatpush1.msra.mxu0 %v375
    %404 = vmatprep.subr.mxu0 0.0
    %405 = vmatpush1.msra.mxu0 %v376
    %406 = vmatprep.subr.mxu0 0.0
    %407 = vmatpush1.msra.mxu0 %v377
    %408 = vmatprep.subr.mxu0 0.0
    %409 = vmatpush1.msra.mxu0 %v378
    %410 = vmatprep.subr.mxu0 0.0
    %411 = vmatpush1.msra.mxu0 %v379
    %412 = vmatprep.subr.mxu0 0.0
    %413 = vmatpush1.msra.mxu0 %v380
    %414 = vmatprep.subr.mxu0 0.0
    %415 = vmatpush1.msra.mxu0 %v381
    %416 = vmatprep.subr.mxu0 0.0
    %417 = vmatpush1.msra.mxu0 %v382
    %418 = vmatprep.subr.mxu0 0.0
    %419 = vmatpush1.msra.mxu0 %v383
    %420 = vmatprep.subr.mxu0 0.0
    %421 = vmatpush1.msra.mxu0 %v384
    %422 = vmatprep.subr.mxu0 0.0
    %423 = vmatpush1.msra.mxu0 %v385
    %424 = vmatprep.subr.mxu0 0.0
    %425 = vmatpush1.msra.mxu0 %v386
    %426 = vmatprep.subr.mxu0 0.0
    %427 = vmatpush1.msra.mxu0 0.0
    %428 = vmatprep.subr.mxu0 0.0
    %429 = vmatpush1.msra.mxu0 0.0
    %430 = vmatprep.subr.mxu0 0.0
    %431 = vmatpush1.msra.mxu0 0.0
    %432 = vmatprep.subr.mxu0 0.0
    %433 = vmatpush1.msra.mxu0 0.0
    %434 = vmatprep.subr.mxu0 0.0
    %435 = vmatpush1.msra.mxu0 0.0
    %436 = vmatprep.subr.mxu0 0.0
    %437 = vmatpush1.msra.mxu0 0.0
    %438 = vmatprep.subr.mxu0 0.0
    %439 = vmatpush1.msra.mxu0 0.0
    %440 = vmatprep.subr.mxu0 0.0
    %441 = vmatpush1.msra.mxu0 0.0
    %442 = vmatprep.subr.mxu0 0.0
    %443 = vmatpush1.msra.mxu0 0.0
    %444 = vmatprep.subr.mxu0 0.0
    %445 = vmatpush1.msra.mxu0 0.0
    %446 = vmatprep.subr.mxu0 0.0
    %447 = vmatpush1.msra.mxu0 0.0
    %448 = vmatprep.subr.mxu0 0.0
    %449 = vmatpush1.msra.mxu0 0.0
    %450 = vmatprep.subr.mxu0 0.0
    %451 = vmatpush1.msra.mxu0 0.0
    %452 = vmatprep.subr.mxu0 0.0
    %453 = vmatpush1.msra.mxu0 0.0
    %454 = vmatprep.subr.mxu0 0.0
    %455 = vmatpush1.msra.mxu0 0.0
    %456 = vmatprep.subr.mxu0 0.0
    %457 = vmatpush1.msra.mxu0 0.0
    %458 = vmatprep.mubr.f32.mxu0 0.0
    %459 = vmatmul.mubr.f32.gmra.mrb[0].mxu0 %v171
    %v460 = vpop.f32.mrb[0].mxu0
    %v461 = vadd.f32 %v392, %v460
    %v462 = vpop.f32.mrb[0].mxu0
    %463 = vmatprep.mubr.f32.mxu0 0.0
    %464 = vmatmul.mubr.f32.gmra.mrb[0].mxu0 %v172
    %v465 = vpop.f32.mrb[0].mxu0
    %v466 = vadd.f32 %v392, %v465
    %v467 = vpop.f32.mrb[0].mxu0
    %468 = vdwg.mxu0
    %469 = vmatprep.subr.mxu0 0.0
    %470 = vmatpush1.xpose.msra.mxu0 %v363
    %471 = vmatprep.subr.mxu0 0.0
    %472 = vmatpush1.xpose.msra.mxu0 0.0
    %473 = vmatprep.subr.mxu0 0.0
    %474 = vmatpush1.xpose.msra.mxu0 0.0
    %475 = vmatprep.subr.mxu0 0.0
    %476 = vmatpush1.xpose.msra.mxu0 0.0
    %477 = vmatprep.subr.mxu0 0.0
    %478 = vmatpush1.xpose.msra.mxu0 0.0
    %479 = vmatprep.subr.mxu0 0.0
    %480 = vmatpush1.xpose.msra.mxu0 0.0
    %481 = vmatprep.subr.mxu0 0.0
    %482 = vmatpush1.xpose.msra.mxu0 0.0
    %483 = vmatprep.subr.mxu0 0.0
    %484 = vmatpush1.xpose.msra.mxu0 0.0
    %485 = vmatprep.subr.mxu0 0.0
    %486 = vmatpush1.xpose.msra.mxu0 0.0
    %487 = vmatprep.subr.mxu0 0.0
    %488 = vmatpush1.xpose.msra.mxu0 0.0
    %489 = vmatprep.subr.mxu0 0.0
    %490 = vmatpush1.xpose.msra.mxu0 0.0
    %491 = vmatprep.subr.mxu0 0.0
    %492 = vmatpush1.xpose.msra.mxu0 0.0
    %493 = vmatprep.subr.mxu0 0.0
    %494 = vmatpush1.xpose.msra.mxu0 0.0
    %495 = vmatprep.subr.mxu0 0.0
    %496 = vmatpush1.xpose.msra.mxu0 0.0
    %497 = vmatprep.subr.mxu0 0.0
    %498 = vmatpush1.xpose.msra.mxu0 0.0
    %499 = vmatprep.subr.mxu0 0.0
    %500 = vmatpush1.xpose.msra.mxu0 0.0
    %501 = vmatprep.subr.mxu0 0.0
    %502 = vmatpush1.xpose.msra.mxu0 0.0
    %503 = vmatprep.subr.mxu0 0.0
    %504 = vmatpush1.xpose.msra.mxu0 0.0
    %505 = vmatprep.subr.mxu0 0.0
    %506 = vmatpush1.xpose.msra.mxu0 0.0
    %507 = vmatprep.subr.mxu0 0.0
    %508 = vmatpush1.xpose.msra.mxu0 0.0
    %509 = vmatprep.subr.mxu0 0.0
    %510 = vmatpush1.xpose.msra.mxu0 0.0
    %511 = vmatprep.subr.mxu0 0.0
    %512 = vmatpush1.xpose.msra.mxu0 0.0
    %513 = vmatprep.subr.mxu0 0.0
    %514 = vmatpush1.xpose.msra.mxu0 0.0
    %515 = vmatprep.subr.mxu0 0.0
    %516 = vmatpush1.xpose.msra.mxu0 0.0
    %517 = vmatprep.subr.mxu0 0.0
    %518 = vmatpush1.xpose.msra.mxu0 0.0
    %519 = vmatprep.subr.mxu0 0.0
    %520 = vmatpush1.xpose.msra.mxu0 0.0
    %521 = vmatprep.subr.mxu0 0.0
    %522 = vmatpush1.xpose.msra.mxu0 0.0
    %523 = vmatprep.subr.mxu0 0.0
    %524 = vmatpush1.xpose.msra.mxu0 0.0
    %525 = vmatprep.subr.mxu0 0.0
    %526 = vmatpush1.xpose.msra.mxu0 0.0
    %527 = vmatprep.subr.mxu0 0.0
    %528 = vmatpush1.xpose.msra.mxu0 0.0
    %529 = vmatprep.subr.mxu0 0.0
    %530 = vmatpush1.xpose.msra.mxu0 0.0
    %531 = vmatprep.subr.mxu0 0.0
    %532 = vmatpush1.xpose.msra.mxu0 0.0
    %533 = vmatprep.mubr.f32.mxu0 0.0
    %534 = vmatmul.mubr.f32.gmra.mrb[0].mxu0 %v271
    %v535 = vpop.f32.mrb[0].mxu0
    %v536 = vadd.f32 0.0, %v535
    %v537 = vpop.f32.mrb[0].mxu0
    %538 = vdwg.mxu0
    %539 = vmatprep.subr.mxu0 0.0
    %540 = vmatpush1.xpose.msra.mxu0 %v368
    %541 = vmatprep.subr.mxu0 0.0
    %542 = vmatpush1.xpose.msra.mxu0 0.0
    %543 = vmatprep.subr.mxu0 0.0
    %544 = vmatpush1.xpose.msra.mxu0 0.0
    %545 = vmatprep.subr.mxu0 0.0
    %546 = vmatpush1.xpose.msra.mxu0 0.0
    %547 = vmatprep.subr.mxu0 0.0
    %548 = vmatpush1.xpose.msra.mxu0 0.0
    %549 = vmatprep.subr.mxu0 0.0
    %550 = vmatpush1.xpose.msra.mxu0 0.0
    %551 = vmatprep.subr.mxu0 0.0
    %552 = vmatpush1.xpose.msra.mxu0 0.0
    %553 = vmatprep.subr.mxu0 0.0
    %554 = vmatpush1.xpose.msra.mxu0 0.0
    %555 = vmatprep.subr.mxu0 0.0
    %556 = vmatpush1.xpose.msra.mxu0 0.0
    %557 = vmatprep.subr.mxu0 0.0
    %558 = vmatpush1.xpose.msra.mxu0 0.0
    %559 = vmatprep.subr.mxu0 0.0
    %560 = vmatpush1.xpose.msra.mxu0 0.0
    %561 = vmatprep.subr.mxu0 0.0
    %562 = vmatpush1.xpose.msra.mxu0 0.0
    %563 = vmatprep.subr.mxu0 0.0
    %564 = vmatpush1.xpose.msra.mxu0 0.0
    %565 = vmatprep.subr.mxu0 0.0
    %566 = vmatpush1.xpose.msra.mxu0 0.0
    %567 = vmatprep.subr.mxu0 0.0
    %568 = vmatpush1.xpose.msra.mxu0 0.0
    %569 = vmatprep.subr.mxu0 0.0
    %570 = vmatpush1.xpose.msra.mxu0 0.0
    %571 = vmatprep.subr.mxu0 0.0
    %572 = vmatpush1.xpose.msra.mxu0 0.0
    %573 = vmatprep.subr.mxu0 0.0
    %574 = vmatpush1.xpose.msra.mxu0 0.0
    %575 = vmatprep.subr.mxu0 0.0
    %576 = vmatpush1.xpose.msra.mxu0 0.0
    %577 = vmatprep.subr.mxu0 0.0
    %578 = vmatpush1.xpose.msra.mxu0 0.0
    %579 = vmatprep.subr.mxu0 0.0
    %580 = vmatpush1.xpose.msra.mxu0 0.0
    %581 = vmatprep.subr.mxu0 0.0
    %582 = vmatpush1.xpose.msra.mxu0 0.0
    %583 = vmatprep.subr.mxu0 0.0
    %584 = vmatpush1.xpose.msra.mxu0 0.0
    %585 = vmatprep.subr.mxu0 0.0
    %586 = vmatpush1.xpose.msra.mxu0 0.0
    %587 = vmatprep.subr.mxu0 0.0
    %588 = vmatpush1.xpose.msra.mxu0 0.0
    %589 = vmatprep.subr.mxu0 0.0
    %590 = vmatpush1.xpose.msra.mxu0 0.0
    %591 = vmatprep.subr.mxu0 0.0
    %592 = vmatpush1.xpose.msra.mxu0 0.0
    %593 = vmatprep.subr.mxu0 0.0
    %594 = vmatpush1.xpose.msra.mxu0 0.0
    %595 = vmatprep.subr.mxu0 0.0
    %596 = vmatpush1.xpose.msra.mxu0 0.0
    %597 = vmatprep.subr.mxu0 0.0
    %598 = vmatpush1.xpose.msra.mxu0 0.0
    %599 = vmatprep.subr.mxu0 0.0
    %600 = vmatpush1.xpose.msra.mxu0 0.0
    %601 = vmatprep.subr.mxu0 0.0
    %602 = vmatpush1.xpose.msra.mxu0 0.0
    %603 = vmatprep.mubr.f32.mxu0 0.0
    %604 = vmatmul.mubr.f32.gmra.mrb[0].mxu0 %v272
    %v605 = vpop.f32.mrb[0].mxu0
    %v606 = vadd.f32 0.0, %v605
    %v607 = vpop.f32.mrb[0].mxu0
    %608 = vdwg.mxu0
    %vm609 = vcmask 64512
    %v610 = vsel %vm609, %v536, -inf
    %611 = vmax.xlane.f32.xlu0 %v610
    %v612 = vpop.xlane.xlu0 %611
    %v613 = vsel %vm609, %v606, -inf
    %614 = vmax.xlane.f32.xlu0 %v613
    %v615 = vpop.xlane.xlu0 %614
    %v616 = vsub.f32 %v536, %v612
    %v617 = vsub.f32 %v606, %v615
    %v618 = vmul.f32 %v616, 1.442695
    %v619 = vpow.pop %v618
    %v620 = vmul.f32 %v617, 1.442695
    %v621 = vpow.pop %v620
    %v622 = vsel %vm609, %v619, 0.0
    %623 = vadd.xlane.f32.xlu0 %v622
    %v624 = vpop.xlane.xlu0 %623
    %v625 = vsel %vm609, %v621, 0.0
    %626 = vadd.xlane.f32.xlu0 %v625
    %v627 = vpop.xlane.xlu0 %626
    %v629 = vsel %vm609, %v619, 0
    %631 = vmatprep.subr.mxu0 0.0
    %632 = vmatpush1.msra.mxu0 %v461
    %633 = vmatprep.subr.mxu0 0.0
    %634 = vmatpush1.msra.mxu0 0.0
    %635 = vmatprep.subr.mxu0 0.0
    %636 = vmatpush1.msra.mxu0 0.0
    %637 = vmatprep.subr.mxu0 0.0
    %638 = vmatpush1.msra.mxu0 0.0
    %639 = vmatprep.subr.mxu0 0.0
    %640 = vmatpush1.msra.mxu0 0.0
    %641 = vmatprep.subr.mxu0 0.0
    %642 = vmatpush1.msra.mxu0 0.0
    %643 = vmatprep.subr.mxu0 0.0
    %644 = vmatpush1.msra.mxu0 0.0
    %645 = vmatprep.subr.mxu0 0.0
    %646 = vmatpush1.msra.mxu0 0.0
    %647 = vmatprep.subr.mxu0 0.0
    %648 = vmatpush1.msra.mxu0 0.0
    %649 = vmatprep.subr.mxu0 0.0
    %650 = vmatpush1.msra.mxu0 0.0
    %651 = vmatprep.subr.mxu0 0.0
    %652 = vmatpush1.msra.mxu0 0.0
    %653 = vmatprep.subr.mxu0 0.0
    %654 = vmatpush1.msra.mxu0 0.0
    %655 = vmatprep.subr.mxu0 0.0
    %656 = vmatpush1.msra.mxu0 0.0
    %657 = vmatprep.subr.mxu0 0.0
    %658 = vmatpush1.msra.mxu0 0.0
    %659 = vmatprep.subr.mxu0 0.0
    %660 = vmatpush1.msra.mxu0 0.0
    %661 = vmatprep.subr.mxu0 0.0
    %662 = vmatpush1.msra.mxu0 0.0
    %663 = vmatprep.subr.mxu0 0.0
    %664 = vmatpush1.msra.mxu0 0.0
    %665 = vmatprep.subr.mxu0 0.0
    %666 = vmatpush1.msra.mxu0 0.0
    %667 = vmatprep.subr.mxu0 0.0
    %668 = vmatpush1.msra.mxu0 0.0
    %669 = vmatprep.subr.mxu0 0.0
    %670 = vmatpush1.msra.mxu0 0.0
    %671 = vmatprep.subr.mxu0 0.0
    %672 = vmatpush1.msra.mxu0 0.0
    %673 = vmatprep.subr.mxu0 0.0
    %674 = vmatpush1.msra.mxu0 0.0
    %675 = vmatprep.subr.mxu0 0.0
    %676 = vmatpush1.msra.mxu0 0.0
    %677 = vmatprep.subr.mxu0 0.0
    %678 = vmatpush1.msra.mxu0 0.0
    %679 = vmatprep.subr.mxu0 0.0
    %680 = vmatpush1.msra.mxu0 0.0
    %681 = vmatprep.subr.mxu0 0.0
    %682 = vmatpush1.msra.mxu0 0.0
    %683 = vmatprep.subr.mxu0 0.0
    %684 = vmatpush1.msra.mxu0 0.0
    %685 = vmatprep.subr.mxu0 0.0
    %686 = vmatpush1.msra.mxu0 0.0
    %687 = vmatprep.subr.mxu0 0.0
    %688 = vmatpush1.msra.mxu0 0.0
    %689 = vmatprep.subr.mxu0 0.0
    %690 = vmatpush1.msra.mxu0 0.0
    %691 = vmatprep.subr.mxu0 0.0
    %692 = vmatpush1.msra.mxu0 0.0
    %693 = vmatprep.subr.mxu0 0.0
    %694 = vmatpush1.msra.mxu0 0.0
    %695 = vmatprep.mubr.f32.mxu0 0.0
    %696 = vmatmul.mubr.f32.gmra.mrb[0].mxu0 %v629
    %v697 = vpop.f32.mrb[0].mxu0
    %v698 = vadd.f32 0.0, %v697
    %v699 = vpop.f32.mrb[0].mxu0
    %700 = vdwg.mxu0
    %v702 = vsel %vm609, %v621, 0
    %704 = vmatprep.subr.mxu0 0.0
    %705 = vmatpush1.msra.mxu0 %v466
    %706 = vmatprep.subr.mxu0 0.0
    %707 = vmatpush1.msra.mxu0 0.0
    %708 = vmatprep.subr.mxu0 0.0
    %709 = vmatpush1.msra.mxu0 0.0
    %710 = vmatprep.subr.mxu0 0.0
    %711 = vmatpush1.msra.mxu0 0.0
    %712 = vmatprep.subr.mxu0 0.0
    %713 = vmatpush1.msra.mxu0 0.0
    %714 = vmatprep.subr.mxu0 0.0
    %715 = vmatpush1.msra.mxu0 0.0
    %716 = vmatprep.subr.mxu0 0.0
    %717 = vmatpush1.msra.mxu0 0.0
    %718 = vmatprep.subr.mxu0 0.0
    %719 = vmatpush1.msra.mxu0 0.0
    %720 = vmatprep.subr.mxu0 0.0
    %721 = vmatpush1.msra.mxu0 0.0
    %722 = vmatprep.subr.mxu0 0.0
    %723 = vmatpush1.msra.mxu0 0.0
    %724 = vmatprep.subr.mxu0 0.0
    %725 = vmatpush1.msra.mxu0 0.0
    %726 = vmatprep.subr.mxu0 0.0
    %727 = vmatpush1.msra.mxu0 0.0
    %728 = vmatprep.subr.mxu0 0.0
    %729 = vmatpush1.msra.mxu0 0.0
    %730 = vmatprep.subr.mxu0 0.0
    %731 = vmatpush1.msra.mxu0 0.0
    %732 = vmatprep.subr.mxu0 0.0
    %733 = vmatpush1.msra.mxu0 0.0
    %734 = vmatprep.subr.mxu0 0.0
    %735 = vmatpush1.msra.mxu0 0.0
    %736 = vmatprep.subr.mxu0 0.0
    %737 = vmatpush1.msra.mxu0 0.0
    %738 = vmatprep.subr.mxu0 0.0
    %739 = vmatpush1.msra.mxu0 0.0
    %740 = vmatprep.subr.mxu0 0.0
    %741 = vmatpush1.msra.mxu0 0.0
    %742 = vmatprep.subr.mxu0 0.0
    %743 = vmatpush1.msra.mxu0 0.0
    %744 = vmatprep.subr.mxu0 0.0
    %745 = vmatpush1.msra.mxu0 0.0
    %746 = vmatprep.subr.mxu0 0.0
    %747 = vmatpush1.msra.mxu0 0.0
    %748 = vmatprep.subr.mxu0 0.0
    %749 = vmatpush1.msra.mxu0 0.0
    %750 = vmatprep.subr.mxu0 0.0
    %751 = vmatpush1.msra.mxu0 0.0
    %752 = vmatprep.subr.mxu0 0.0
    %753 = vmatpush1.msra.mxu0 0.0
    %754 = vmatprep.subr.mxu0 0.0
    %755 = vmatpush1.msra.mxu0 0.0
    %756 = vmatprep.subr.mxu0 0.0
    %757 = vmatpush1.msra.mxu0 0.0
    %758 = vmatprep.subr.mxu0 0.0
    %759 = vmatpush1.msra.mxu0 0.0
    %760 = vmatprep.subr.mxu0 0.0
    %761 = vmatpush1.msra.mxu0 0.0
    %762 = vmatprep.subr.mxu0 0.0
    %763 = vmatpush1.msra.mxu0 0.0
    %764 = vmatprep.subr.mxu0 0.0
    %765 = vmatpush1.msra.mxu0 0.0
    %766 = vmatprep.subr.mxu0 0.0
    %767 = vmatpush1.msra.mxu0 0.0
    %768 = vmatprep.mubr.f32.mxu0 0.0
    %769 = vmatmul.mubr.f32.gmra.mrb[0].mxu0 %v702
    %v770 = vpop.f32.mrb[0].mxu0
    %v771 = vadd.f32 0.0, %v770
    %v772 = vpop.f32.mrb[0].mxu0
    %773 = vdwg.mxu0
    %v774 = vrcp.pop %v624
    %v775 = vrcp.pop %v627
    %v776 = vmul.f32 %v698, %v774
    %v777 = vmul.f32 %v771, %v775
    %v778 = vld [vmem:[#allocation11] sm:$0xff]
    %v779 = vld [vmem:[#allocation11 + $0x8] sm:$0xff]
    %v780 = vld [vmem:[#allocation11 + $0x10] sm:$0xff]
    %v781 = vld [vmem:[#allocation11 + $0x18] sm:$0xff]
    %v782 = vld [vmem:[#allocation11 + $0x20] sm:$0xff]
    %v783 = vld [vmem:[#allocation11 + $0x28] sm:$0xff]
    %v784 = vld [vmem:[#allocation11 + $0x30] sm:$0xff]
    %v785 = vld [vmem:[#allocation11 + $0x38] sm:$0xff]
    %v786 = vld [vmem:[#allocation11 + $0x40] sm:$0xff]
    %v787 = vld [vmem:[#allocation11 + $0x48] sm:$0xff]
    %v788 = vld [vmem:[#allocation11 + $0x50] sm:$0xff]
    %v789 = vld [vmem:[#allocation11 + $0x58] sm:$0xff]
    %v790 = vld [vmem:[#allocation11 + $0x60] sm:$0xff]
    %v791 = vld [vmem:[#allocation11 + $0x68] sm:$0xff]
    %v792 = vld [vmem:[#allocation11 + $0x70] sm:$0xff]
    %v793 = vld [vmem:[#allocation11 + $0x78] sm:$0xff]
    %v794 = vld [vmem:[%s9] sm:$0x1]
    %v796 = vlaneseq
    %v797 = vshrl.u32 %v796, 7
    %v798 = vsub.s32 0, %v797
    %v799 = vrot.slane %v794, %v798
    %801 = vmatprep.subr.mxu0 0.0
    %802 = vmatpush1.msra.mxu0 %v778
    %803 = vmatprep.subr.mxu0 0.0
    %804 = vmatpush1.msra.mxu0 %v779
    %805 = vmatprep.subr.mxu0 0.0
    %806 = vmatpush1.msra.mxu0 %v780
    %807 = vmatprep.subr.mxu0 0.0
    %808 = vmatpush1.msra.mxu0 %v781
    %809 = vmatprep.subr.mxu0 0.0
    %810 = vmatpush1.msra.mxu0 %v782
    %811 = vmatprep.subr.mxu0 0.0
    %812 = vmatpush1.msra.mxu0 %v783
    %813 = vmatprep.subr.mxu0 0.0
    %814 = vmatpush1.msra.mxu0 %v784
    %815 = vmatprep.subr.mxu0 0.0
    %816 = vmatpush1.msra.mxu0 %v785
    %817 = vmatprep.subr.mxu0 0.0
    %818 = vmatpush1.msra.mxu0 %v786
    %819 = vmatprep.subr.mxu0 0.0
    %820 = vmatpush1.msra.mxu0 %v787
    %821 = vmatprep.subr.mxu0 0.0
    %822 = vmatpush1.msra.mxu0 %v788
    %823 = vmatprep.subr.mxu0 0.0
    %824 = vmatpush1.msra.mxu0 %v789
    %825 = vmatprep.subr.mxu0 0.0
    %826 = vmatpush1.msra.mxu0 %v790
    %827 = vmatprep.subr.mxu0 0.0
    %828 = vmatpush1.msra.mxu0 %v791
    %829 = vmatprep.subr.mxu0 0.0
    %830 = vmatpush1.msra.mxu0 %v792
    %831 = vmatprep.subr.mxu0 0.0
    %832 = vmatpush1.msra.mxu0 %v793
    %833 = vmatprep.subr.mxu0 0.0
    %834 = vmatpush1.msra.mxu0 0.0
    %835 = vmatprep.subr.mxu0 0.0
    %836 = vmatpush1.msra.mxu0 0.0
    %837 = vmatprep.subr.mxu0 0.0
    %838 = vmatpush1.msra.mxu0 0.0
    %839 = vmatprep.subr.mxu0 0.0
    %840 = vmatpush1.msra.mxu0 0.0
    %841 = vmatprep.subr.mxu0 0.0
    %842 = vmatpush1.msra.mxu0 0.0
    %843 = vmatprep.subr.mxu0 0.0
    %844 = vmatpush1.msra.mxu0 0.0
    %845 = vmatprep.subr.mxu0 0.0
    %846 = vmatpush1.msra.mxu0 0.0
    %847 = vmatprep.subr.mxu0 0.0
    %848 = vmatpush1.msra.mxu0 0.0
    %849 = vmatprep.subr.mxu0 0.0
    %850 = vmatpush1.msra.mxu0 0.0
    %851 = vmatprep.subr.mxu0 0.0
    %852 = vmatpush1.msra.mxu0 0.0
    %853 = vmatprep.subr.mxu0 0.0
    %854 = vmatpush1.msra.mxu0 0.0
    %855 = vmatprep.subr.mxu0 0.0
    %856 = vmatpush1.msra.mxu0 0.0
    %857 = vmatprep.subr.mxu0 0.0
    %858 = vmatpush1.msra.mxu0 0.0
    %859 = vmatprep.subr.mxu0 0.0
    %860 = vmatpush1.msra.mxu0 0.0
    %861 = vmatprep.subr.mxu0 0.0
    %862 = vmatpush1.msra.mxu0 0.0
    %863 = vmatprep.subr.mxu0 0.0
    %864 = vmatpush1.msra.mxu0 0.0
    %865 = vmatprep.mubr.f32.mxu0 0.0
    %866 = vmatmul.mubr.f32.gmra.mrb[0].mxu0 %v776
    %v867 = vpop.f32.mrb[0].mxu0
    %v868 = vadd.f32 %v799, %v867
    %v869 = vpop.f32.mrb[0].mxu0
    %870 = vmatprep.mubr.f32.mxu0 0.0
    %871 = vmatmul.mubr.f32.gmra.mrb[0].mxu0 %v777
    %v872 = vpop.f32.mrb[0].mxu0
    %v873 = vadd.f32 %v799, %v872
    %v874 = vpop.f32.mrb[0].mxu0
    %875 = vdwg.mxu0
    %v876 = vadd.f32 %v868, %v169
    %v877 = vadd.f32 %v873, %v170
    %v878 = vld [vmem:[%s10] sm:$0x1]
    %v879 = vld [vmem:[%s11] sm:$0x1]
    %880 = vadd.xlane.f32.xlu0 %v876
    %v881 = vpop.xlane.xlu0 %880
    %882 = vadd.xlane.f32.xlu0 %v877
    %v883 = vpop.xlane.xlu0 %882
    %v884 = vrcp.pop 128.0
    %v885 = vmul.f32 %v881, %v884
    %v886 = vmul.f32 %v883, %v884
    %v887 = vsub.f32 %v876, %v885
    %v888 = vsub.f32 %v877, %v886
    %v889 = vmul.f32 %v887, %v887
    %v890 = vmul.f32 %v888, %v888
    %891 = vadd.xlane.f32.xlu0 %v889
    %v892 = vpop.xlane.xlu0 %891
    %893 = vadd.xlane.f32.xlu0 %v890
    %v894 = vpop.xlane.xlu0 %893
    %v895 = vmul.f32 %v892, %v884
    %v896 = vmul.f32 %v894, %v884
    %v897 = vadd.f32 %v895, 1e-05
    %v898 = vadd.f32 %v896, 1e-05
    %v899 = vrsqrt.pop %v897
    %v900 = vrsqrt.pop %v898
    %v901 = vmul.f32 %v887, %v899
    %v902 = vmul.f32 %v888, %v900
    %v904 = vlaneseq
    %v905 = vshrl.u32 %v904, 7
    %v906 = vsub.s32 0, %v905
    %v907 = vrot.slane %v878, %v906
    %v909 = vmul.f32 %v901, %v907
    %v910 = vmul.f32 %v902, %v907
    %v912 = vlaneseq
    %v913 = vshrl.u32 %v912, 7
    %v914 = vsub.s32 0, %v913
    %v915 = vrot.slane %v879, %v914
    %v917 = vadd.f32 %v909, %v915
    %v918 = vadd.f32 %v910, %v915
    %v919 = vld [vmem:[#allocation13] sm:$0xff]
    %v920 = vld [vmem:[#allocation13 + $0x8] sm:$0xff]
    %v921 = vld [vmem:[#allocation13 + $0x10] sm:$0xff]
    %v922 = vld [vmem:[#allocation13 + $0x18] sm:$0xff]
    %v923 = vld [vmem:[#allocation13 + $0x20] sm:$0xff]
    %v924 = vld [vmem:[#allocation13 + $0x28] sm:$0xff]
    %v925 = vld [vmem:[#allocation13 + $0x30] sm:$0xff]
    %v926 = vld [vmem:[#allocation13 + $0x38] sm:$0xff]
    %v927 = vld [vmem:[#allocation13 + $0x40] sm:$0xff]
    %v928 = vld [vmem:[#allocation13 + $0x48] sm:$0xff]
    %v929 = vld [vmem:[#allocation13 + $0x50] sm:$0xff]
    %v930 = vld [vmem:[#allocation13 + $0x58] sm:$0xff]
    %v931 = vld [vmem:[#allocation13 + $0x60] sm:$0xff]
    %v932 = vld [vmem:[#allocation13 + $0x68] sm:$0xff]
    %v933 = vld [vmem:[#allocation13 + $0x70] sm:$0xff]
    %v934 = vld [vmem:[#allocation13 + $0x78] sm:$0xff]
    %v935 = vld [vmem:[#allocation13 + $0x80] sm:$0xff]
    %v936 = vld [vmem:[#allocation13 + $0x88] sm:$0xff]
    %v937 = vld [vmem:[#allocation13 + $0x90] sm:$0xff]
    %v938 = vld [vmem:[#allocation13 + $0x98] sm:$0xff]
    %v939 = vld [vmem:[#allocation13 + $0xa0] sm:$0xff]
    %v940 = vld [vmem:[#allocation13 + $0xa8] sm:$0xff]
    %v941 = vld [vmem:[#allocation13 + $0xb0] sm:$0xff]
    %v942 = vld [vmem:[#allocation13 + $0xb8] sm:$0xff]
    %v943 = vld [vmem:[#allocation13 + $0xc0] sm:$0xff]
    %v944 = vld [vmem:[#allocation13 + $0xc8] sm:$0xff]
    %v945 = vld [vmem:[#allocation13 + $0xd0] sm:$0xff]
    %v946 = vld [vmem:[#allocation13 + $0xd8] sm:$0xff]
    %v947 = vld [vmem:[#allocation13 + $0xe0] sm:$0xff]
    %v948 = vld [vmem:[#allocation13 + $0xe8] sm:$0xff]
    %v949 = vld [vmem:[#allocation13 + $0xf0] sm:$0xff]
    %v950 = vld [vmem:[#allocation13 + $0xf8] sm:$0xff]
    %v951 = vld [vmem:[#allocation13 + $0x100] sm:$0xff]
    %v952 = vld [vmem:[#allocation13 + $0x108] sm:$0xff]
    %v953 = vld [vmem:[#allocation13 + $0x110] sm:$0xff]
    %v954 = vld [vmem:[#allocation13 + $0x118] sm:$0xff]
    %v955 = vld [vmem:[#allocation13 + $0x120] sm:$0xff]
    %v956 = vld [vmem:[#allocation13 + $0x128] sm:$0xff]
    %v957 = vld [vmem:[#allocation13 + $0x130] sm:$0xff]
    %v958 = vld [vmem:[#allocation13 + $0x138] sm:$0xff]
    %v959 = vld [vmem:[#allocation13 + $0x140] sm:$0xff]
    %v960 = vld [vmem:[#allocation13 + $0x148] sm:$0xff]
    %v961 = vld [vmem:[#allocation13 + $0x150] sm:$0xff]
    %v962 = vld [vmem:[#allocation13 + $0x158] sm:$0xff]
    %v963 = vld [vmem:[#allocation13 + $0x160] sm:$0xff]
    %v964 = vld [vmem:[#allocation13 + $0x168] sm:$0xff]
    %v965 = vld [vmem:[#allocation13 + $0x170] sm:$0xff]
    %v966 = vld [vmem:[#allocation13 + $0x178] sm:$0xff]
    %v967 = vld [vmem:[#allocation13 + $0x180] sm:$0xff]
    %v968 = vld [vmem:[#allocation13 + $0x188] sm:$0xff]
    %v969 = vld [vmem:[#allocation13 + $0x190] sm:$0xff]
    %v970 = vld [vmem:[#allocation13 + $0x198] sm:$0xff]
    %v971 = vld [vmem:[#allocation13 + $0x1a0] sm:$0xff]
    %v972 = vld [vmem:[#allocation13 + $0x1a8] sm:$0xff]
    %v973 = vld [vmem:[#allocation13 + $0x1b0] sm:$0xff]
    %v974 = vld [vmem:[#allocation13 + $0x1b8] sm:$0xff]
    %v975 = vld [vmem:[#allocation13 + $0x1c0] sm:$0xff]
    %v976 = vld [vmem:[#allocation13 + $0x1c8] sm:$0xff]
    %v977 = vld [vmem:[#allocation13 + $0x1d0] sm:$0xff]
    %v978 = vld [vmem:[#allocation13 + $0x1d8] sm:$0xff]
    %v979 = vld [vmem:[#allocation13 + $0x1e0] sm:$0xff]
    %v980 = vld [vmem:[#allocation13 + $0x1e8] sm:$0xff]
    %v981 = vld [vmem:[#allocation13 + $0x1f0] sm:$0xff]
    %v982 = vld [vmem:[#allocation13 + $0x1f8] sm:$0xff]
    %v983 = vld [vmem:[%s13] sm:$0xf]
    %v985 = vlaneseq
    %v986 = vshrl.u32 %v985, 7
    %v987 = vsub.s32 0, %v986
    %v988 = vrot.slane %v983, %v987
    %v989 = vlaneseq
    %v990 = vshrl.u32 %v989, 7
    %v991 = vsub.s32 1, %v990
    %v992 = vrot.slane %v983, %v991
    %v993 = vlaneseq
    %v994 = vshrl.u32 %v993, 7
    %v995 = vsub.s32 2, %v994
    %v996 = vrot.slane %v983, %v995
    %v997 = vlaneseq
    %v998 = vshrl.u32 %v997, 7
    %v999 = vsub.s32 3, %v998
    %v1000 = vrot.slane %v983, %v999
    %1005 = vmatprep.subr.mxu0 %v920
    %1006 = vmatpush1.msra.mxu0 %v919
    %1007 = vmatprep.subr.mxu0 %v924
    %1008 = vmatpush1.msra.mxu0 %v923
    %1009 = vmatprep.subr.mxu0 %v928
    %1010 = vmatpush1.msra.mxu0 %v927
    %1011 = vmatprep.subr.mxu0 %v932
    %1012 = vmatpush1.msra.mxu0 %v931
    %1013 = vmatprep.subr.mxu0 %v936
    %1014 = vmatpush1.msra.mxu0 %v935
    %1015 = vmatprep.subr.mxu0 %v940
    %1016 = vmatpush1.msra.mxu0 %v939
    %1017 = vmatprep.subr.mxu0 %v944
    %1018 = vmatpush1.msra.mxu0 %v943
    %1019 = vmatprep.subr.mxu0 %v948
    %1020 = vmatpush1.msra.mxu0 %v947
    %1021 = vmatprep.subr.mxu0 %v952
    %1022 = vmatpush1.msra.mxu0 %v951
    %1023 = vmatprep.subr.mxu0 %v956
    %1024 = vmatpush1.msra.mxu0 %v955
    %1025 = vmatprep.subr.mxu0 %v960
    %1026 = vmatpush1.msra.mxu0 %v959
    %1027 = vmatprep.subr.mxu0 %v964
    %1028 = vmatpush1.msra.mxu0 %v963
    %1029 = vmatprep.subr.mxu0 %v968
    %1030 = vmatpush1.msra.mxu0 %v967
    %1031 = vmatprep.subr.mxu0 %v972
    %1032 = vmatpush1.msra.mxu0 %v971
    %1033 = vmatprep.subr.mxu0 %v976
    %1034 = vmatpush1.msra.mxu0 %v975
    %1035 = vmatprep.subr.mxu0 %v980
    %1036 = vmatpush1.msra.mxu0 %v979
    %1037 = vmatprep.subr.mxu0 0.0
    %1038 = vmatpush1.msra.mxu0 0.0
    %1039 = vmatprep.subr.mxu0 0.0
    %1040 = vmatpush1.msra.mxu0 0.0
    %1041 = vmatprep.subr.mxu0 0.0
    %1042 = vmatpush1.msra.mxu0 0.0
    %1043 = vmatprep.subr.mxu0 0.0
    %1044 = vmatpush1.msra.mxu0 0.0
    %1045 = vmatprep.subr.mxu0 0.0
    %1046 = vmatpush1.msra.mxu0 0.0
    %1047 = vmatprep.subr.mxu0 0.0
    %1048 = vmatpush1.msra.mxu0 0.0
    %1049 = vmatprep.subr.mxu0 0.0
    %1050 = vmatpush1.msra.mxu0 0.0
    %1051 = vmatprep.subr.mxu0 0.0
    %1052 = vmatpush1.msra.mxu0 0.0
    %1053 = vmatprep.subr.mxu0 0.0
    %1054 = vmatpush1.msra.mxu0 0.0
    %1055 = vmatprep.subr.mxu0 0.0
    %1056 = vmatpush1.msra.mxu0 0.0
    %1057 = vmatprep.subr.mxu0 0.0
    %1058 = vmatpush1.msra.mxu0 0.0
    %1059 = vmatprep.subr.mxu0 0.0
    %1060 = vmatpush1.msra.mxu0 0.0
    %1061 = vmatprep.subr.mxu0 0.0
    %1062 = vmatpush1.msra.mxu0 0.0
    %1063 = vmatprep.subr.mxu0 0.0
    %1064 = vmatpush1.msra.mxu0 0.0
    %1065 = vmatprep.subr.mxu0 0.0
    %1066 = vmatpush1.msra.mxu0 0.0
    %1067 = vmatprep.subr.mxu0 0.0
    %1068 = vmatpush1.msra.mxu0 0.0
    %1069 = vmatprep.mubr.f32.mxu0 0.0
    %1070 = vmatmul.mubr.f32.gmra.mrb[0].mxu0 %v917
    %v1071 = vpop.f32.mrb[0].mxu0
    %v1072 = vadd.f32 %v988, %v1071
    %v1073 = vpop.f32.mrb[0].mxu0
    %v1074 = vadd.f32 %v992, %v1073
    %1075 = vmatprep.mubr.f32.mxu0 0.0
    %1076 = vmatmul.mubr.f32.gmra.mrb[0].mxu0 %v918
    %v1077 = vpop.f32.mrb[0].mxu0
    %v1078 = vadd.f32 %v988, %v1077
    %v1079 = vpop.f32.mrb[0].mxu0
    %v1080 = vadd.f32 %v992, %v1079
    %1081 = vdwg.mxu0
    %1082 = vmatprep.subr.mxu0 %v922
    %1083 = vmatpush1.msra.mxu0 %v921
    %1084 = vmatprep.subr.mxu0 %v926
    %1085 = vmatpush1.msra.mxu0 %v925
    %1086 = vmatprep.subr.mxu0 %v930
    %1087 = vmatpush1.msra.mxu0 %v929
    %1088 = vmatprep.subr.mxu0 %v934
    %1089 = vmatpush1.msra.mxu0 %v933
    %1090 = vmatprep.subr.mxu0 %v938
    %1091 = vmatpush1.msra.mxu0 %v937
    %1092 = vmatprep.subr.mxu0 %v942
    %1093 = vmatpush1.msra.mxu0 %v941
    %1094 = vmatprep.subr.mxu0 %v946
    %1095 = vmatpush1.msra.mxu0 %v945
    %1096 = vmatprep.subr.mxu0 %v950
    %1097 = vmatpush1.msra.mxu0 %v949
    %1098 = vmatprep.subr.mxu0 %v954
    %1099 = vmatpush1.msra.mxu0 %v953
    %1100 = vmatprep.subr.mxu0 %v958
    %1101 = vmatpush1.msra.mxu0 %v957
    %1102 = vmatprep.subr.mxu0 %v962
    %1103 = vmatpush1.msra.mxu0 %v961
    %1104 = vmatprep.subr.mxu0 %v966
    %1105 = vmatpush1.msra.mxu0 %v965
    %1106 = vmatprep.subr.mxu0 %v970
    %1107 = vmatpush1.msra.mxu0 %v969
    %1108 = vmatprep.subr.mxu0 %v974
    %1109 = vmatpush1.msra.mxu0 %v973
    %1110 = vmatprep.subr.mxu0 %v978
    %1111 = vmatpush1.msra.mxu0 %v977
    %1112 = vmatprep.subr.mxu0 %v982
    %1113 = vmatpush1.msra.mxu0 %v981
    %1114 = vmatprep.subr.mxu0 0.0
    %1115 = vmatpush1.msra.mxu0 0.0
    %1116 = vmatprep.subr.mxu0 0.0
    %1117 = vmatpush1.msra.mxu0 0.0
    %1118 = vmatprep.subr.mxu0 0.0
    %1119 = vmatpush1.msra.mxu0 0.0
    %1120 = vmatprep.subr.mxu0 0.0
    %1121 = vmatpush1.msra.mxu0 0.0
    %1122 = vmatprep.subr.mxu0 0.0
    %1123 = vmatpush1.msra.mxu0 0.0
    %1124 = vmatprep.subr.mxu0 0.0
    %1125 = vmatpush1.msra.mxu0 0.0
    %1126 = vmatprep.subr.mxu0 0.0
    %1127 = vmatpush1.msra.mxu0 0.0
    %1128 = vmatprep.subr.mxu0 0.0
    %1129 = vmatpush1.msra.mxu0 0.0
    %1130 = vmatprep.subr.mxu0 0.0
    %1131 = vmatpush1.msra.mxu0 0.0
    %1132 = vmatprep.subr.mxu0 0.0
    %1133 = vmatpush1.msra.mxu0 0.0
    %1134 = vmatprep.subr.mxu0 0.0
    %1135 = vmatpush1.msra.mxu0 0.0
    %1136 = vmatprep.subr.mxu0 0.0
    %1137 = vmatpush1.msra.mxu0 0.0
    %1138 = vmatprep.subr.mxu0 0.0
    %1139 = vmatpush1.msra.mxu0 0.0
    %1140 = vmatprep.subr.mxu0 0.0
    %1141 = vmatpush1.msra.mxu0 0.0
    %1142 = vmatprep.subr.mxu0 0.0
    %1143 = vmatpush1.msra.mxu0 0.0
    %1144 = vmatprep.subr.mxu0 0.0
    %1145 = vmatpush1.msra.mxu0 0.0
    %1146 = vmatprep.mubr.f32.mxu0 0.0
    %1147 = vmatmul.mubr.f32.gmra.mrb[0].mxu0 %v917
    %v1148 = vpop.f32.mrb[0].mxu0
    %v1149 = vadd.f32 %v996, %v1148
    %v1150 = vpop.f32.mrb[0].mxu0
    %v1151 = vadd.f32 %v1000, %v1150
    %1152 = vmatprep.mubr.f32.mxu0 0.0
    %1153 = vmatmul.mubr.f32.gmra.mrb[0].mxu0 %v918
    %v1154 = vpop.f32.mrb[0].mxu0
    %v1155 = vadd.f32 %v996, %v1154
    %v1156 = vpop.f32.mrb[0].mxu0
    %v1157 = vadd.f32 %v1000, %v1156
    %1158 = vdwg.mxu0
    %vm1159 = vcmp.ge.f32.partialorder %v1072, 0.0
    %vm1160 = vcmp.ge.f32.partialorder %v1074, 0.0
    %vm1161 = vcmp.ge.f32.partialorder %v1149, 0.0
    %vm1162 = vcmp.ge.f32.partialorder %v1151, 0.0
    %vm1163 = vcmp.ge.f32.partialorder %v1078, 0.0
    %vm1164 = vcmp.ge.f32.partialorder %v1080, 0.0
    %vm1165 = vcmp.ge.f32.partialorder %v1155, 0.0
    %vm1166 = vcmp.ge.f32.partialorder %v1157, 0.0
    %v1167 = vmul.f32 %v1072, 0.02
    %v1168 = vmul.f32 %v1074, 0.02
    %v1169 = vmul.f32 %v1149, 0.02
    %v1170 = vmul.f32 %v1151, 0.02
    %v1171 = vmul.f32 %v1078, 0.02
    %v1172 = vmul.f32 %v1080, 0.02
    %v1173 = vmul.f32 %v1155, 0.02
    %v1174 = vmul.f32 %v1157, 0.02
    %v1175 = vsel %vm1159, %v1072, %v1167
    %v1176 = vsel %vm1160, %v1074, %v1168
    %v1177 = vsel %vm1161, %v1149, %v1169
    %v1178 = vsel %vm1162, %v1151, %v1170
    %v1179 = vsel %vm1163, %v1078, %v1171
    %v1180 = vsel %vm1164, %v1080, %v1172
    %v1181 = vsel %vm1165, %v1155, %v1173
    %v1182 = vsel %vm1166, %v1157, %v1174
    %v1183 = vld [vmem:[#allocation14] sm:$0xff]
    %v1184 = vld [vmem:[#allocation14 + $0x8] sm:$0xff]
    %v1185 = vld [vmem:[#allocation14 + $0x10] sm:$0xff]
    %v1186 = vld [vmem:[#allocation14 + $0x18] sm:$0xff]
    %v1187 = vld [vmem:[#allocation14 + $0x20] sm:$0xff]
    %v1188 = vld [vmem:[#allocation14 + $0x28] sm:$0xff]
    %v1189 = vld [vmem:[#allocation14 + $0x30] sm:$0xff]
    %v1190 = vld [vmem:[#allocation14 + $0x38] sm:$0xff]
    %v1191 = vld [vmem:[#allocation14 + $0x40] sm:$0xff]
    %v1192 = vld [vmem:[#allocation14 + $0x48] sm:$0xff]
    %v1193 = vld [vmem:[#allocation14 + $0x50] sm:$0xff]
    %v1194 = vld [vmem:[#allocation14 + $0x58] sm:$0xff]
    %v1195 = vld [vmem:[#allocation14 + $0x60] sm:$0xff]
    %v1196 = vld [vmem:[#allocation14 + $0x68] sm:$0xff]
    %v1197 = vld [vmem:[#allocation14 + $0x70] sm:$0xff]
    %v1198 = vld [vmem:[#allocation14 + $0x78] sm:$0xff]
    %v1199 = vld [vmem:[#allocation14 + $0x80] sm:$0xff]
    %v1200 = vld [vmem:[#allocation14 + $0x88] sm:$0xff]
    %v1201 = vld [vmem:[#allocation14 + $0x90] sm:$0xff]
    %v1202 = vld [vmem:[#allocation14 + $0x98] sm:$0xff]
    %v1203 = vld [vmem:[#allocation14 + $0xa0] sm:$0xff]
    %v1204 = vld [vmem:[#allocation14 + $0xa8] sm:$0xff]
    %v1205 = vld [vmem:[#allocation14 + $0xb0] sm:$0xff]
    %v1206 = vld [vmem:[#allocation14 + $0xb8] sm:$0xff]
    %v1207 = vld [vmem:[#allocation14 + $0xc0] sm:$0xff]
    %v1208 = vld [vmem:[#allocation14 + $0xc8] sm:$0xff]
    %v1209 = vld [vmem:[#allocation14 + $0xd0] sm:$0xff]
    %v1210 = vld [vmem:[#allocation14 + $0xd8] sm:$0xff]
    %v1211 = vld [vmem:[#allocation14 + $0xe0] sm:$0xff]
    %v1212 = vld [vmem:[#allocation14 + $0xe8] sm:$0xff]
    %v1213 = vld [vmem:[#allocation14 + $0xf0] sm:$0xff]
    %v1214 = vld [vmem:[#allocation14 + $0xf8] sm:$0xff]
    %v1215 = vld [vmem:[#allocation14 + $0x100] sm:$0xff]
    %v1216 = vld [vmem:[#allocation14 + $0x108] sm:$0xff]
    %v1217 = vld [vmem:[#allocation14 + $0x110] sm:$0xff]
    %v1218 = vld [vmem:[#allocation14 + $0x118] sm:$0xff]
    %v1219 = vld [vmem:[#allocation14 + $0x120] sm:$0xff]
    %v1220 = vld [vmem:[#allocation14 + $0x128] sm:$0xff]
    %v1221 = vld [vmem:[#allocation14 + $0x130] sm:$0xff]
    %v1222 = vld [vmem:[#allocation14 + $0x138] sm:$0xff]
    %v1223 = vld [vmem:[#allocation14 + $0x140] sm:$0xff]
    %v1224 = vld [vmem:[#allocation14 + $0x148] sm:$0xff]
    %v1225 = vld [vmem:[#allocation14 + $0x150] sm:$0xff]
    %v1226 = vld [vmem:[#allocation14 + $0x158] sm:$0xff]
    %v1227 = vld [vmem:[#allocation14 + $0x160] sm:$0xff]
    %v1228 = vld [vmem:[#allocation14 + $0x168] sm:$0xff]
    %v1229 = vld [vmem:[#allocation14 + $0x170] sm:$0xff]
    %v1230 = vld [vmem:[#allocation14 + $0x178] sm:$0xff]
    %v1231 = vld [vmem:[#allocation14 + $0x180] sm:$0xff]
    %v1232 = vld [vmem:[#allocation14 + $0x188] sm:$0xff]
    %v1233 = vld [vmem:[#allocation14 + $0x190] sm:$0xff]
    %v1234 = vld [vmem:[#allocation14 + $0x198] sm:$0xff]
    %v1235 = vld [vmem:[#allocation14 + $0x1a0] sm:$0xff]
    %v1236 = vld [vmem:[#allocation14 + $0x1a8] sm:$0xff]
    %v1237 = vld [vmem:[#allocation14 + $0x1b0] sm:$0xff]
    %v1238 = vld [vmem:[#allocation14 + $0x1b8] sm:$0xff]
    %v1239 = vld [vmem:[#allocation14 + $0x1c0] sm:$0xff]
    %v1240 = vld [vmem:[#allocation14 + $0x1c8] sm:$0xff]
    %v1241 = vld [vmem:[#allocation14 + $0x1d0] sm:$0xff]
    %v1242 = vld [vmem:[#allocation14 + $0x1d8] sm:$0xff]
    %v1243 = vld [vmem:[#allocation14 + $0x1e0] sm:$0xff]
    %v1244 = vld [vmem:[#allocation14 + $0x1e8] sm:$0xff]
    %v1245 = vld [vmem:[#allocation14 + $0x1f0] sm:$0xff]
    %v1246 = vld [vmem:[#allocation14 + $0x1f8] sm:$0xff]
    %v1247 = vld [vmem:[%s15] sm:$0x1]
    %v1249 = vlaneseq
    %v1250 = vshrl.u32 %v1249, 7
    %v1251 = vsub.s32 0, %v1250
    %v1252 = vrot.slane %v1247, %v1251
    %1254 = vmatprep.subr.mxu0 0.0
    %1255 = vmatpush1.msra.mxu0 %v1183
    %1256 = vmatprep.subr.mxu0 0.0
    %1257 = vmatpush1.msra.mxu0 %v1184
    %1258 = vmatprep.subr.mxu0 0.0
    %1259 = vmatpush1.msra.mxu0 %v1185
    %1260 = vmatprep.subr.mxu0 0.0
    %1261 = vmatpush1.msra.mxu0 %v1186
    %1262 = vmatprep.subr.mxu0 0.0
    %1263 = vmatpush1.msra.mxu0 %v1187
    %1264 = vmatprep.subr.mxu0 0.0
    %1265 = vmatpush1.msra.mxu0 %v1188
    %1266 = vmatprep.subr.mxu0 0.0
    %1267 = vmatpush1.msra.mxu0 %v1189
    %1268 = vmatprep.subr.mxu0 0.0
    %1269 = vmatpush1.msra.mxu0 %v1190
    %1270 = vmatprep.subr.mxu0 0.0
    %1271 = vmatpush1.msra.mxu0 %v1191
    %1272 = vmatprep.subr.mxu0 0.0
    %1273 = vmatpush1.msra.mxu0 %v1192
    %1274 = vmatprep.subr.mxu0 0.0
    %1275 = vmatpush1.msra.mxu0 %v1193
    %1276 = vmatprep.subr.mxu0 0.0
    %1277 = vmatpush1.msra.mxu0 %v1194
    %1278 = vmatprep.subr.mxu0 0.0
    %1279 = vmatpush1.msra.mxu0 %v1195
    %1280 = vmatprep.subr.mxu0 0.0
    %1281 = vmatpush1.msra.mxu0 %v1196
    %1282 = vmatprep.subr.mxu0 0.0
    %1283 = vmatpush1.msra.mxu0 %v1197
    %1284 = vmatprep.subr.mxu0 0.0
    %1285 = vmatpush1.msra.mxu0 %v1198
    %1286 = vmatprep.subr.mxu0 0.0
    %1287 = vmatpush1.msra.mxu0 %v1199
    %1288 = vmatprep.subr.mxu0 0.0
    %1289 = vmatpush1.msra.mxu0 %v1200
    %1290 = vmatprep.subr.mxu0 0.0
    %1291 = vmatpush1.msra.mxu0 %v1201
    %1292 = vmatprep.subr.mxu0 0.0
    %1293 = vmatpush1.msra.mxu0 %v1202
    %1294 = vmatprep.subr.mxu0 0.0
    %1295 = vmatpush1.msra.mxu0 %v1203
    %1296 = vmatprep.subr.mxu0 0.0
    %1297 = vmatpush1.msra.mxu0 %v1204
    %1298 = vmatprep.subr.mxu0 0.0
    %1299 = vmatpush1.msra.mxu0 %v1205
    %1300 = vmatprep.subr.mxu0 0.0
    %1301 = vmatpush1.msra.mxu0 %v1206
    %1302 = vmatprep.subr.mxu0 0.0
    %1303 = vmatpush1.msra.mxu0 %v1207
    %1304 = vmatprep.subr.mxu0 0.0
    %1305 = vmatpush1.msra.mxu0 %v1208
    %1306 = vmatprep.subr.mxu0 0.0
    %1307 = vmatpush1.msra.mxu0 %v1209
    %1308 = vmatprep.subr.mxu0 0.0
    %1309 = vmatpush1.msra.mxu0 %v1210
    %1310 = vmatprep.subr.mxu0 0.0
    %1311 = vmatpush1.msra.mxu0 %v1211
    %1312 = vmatprep.subr.mxu0 0.0
    %1313 = vmatpush1.msra.mxu0 %v1212
    %1314 = vmatprep.subr.mxu0 0.0
    %1315 = vmatpush1.msra.mxu0 %v1213
    %1316 = vmatprep.subr.mxu0 0.0
    %1317 = vmatpush1.msra.mxu0 %v1214
    %1318 = vmatprep.mubr.f32.mxu0 %v1176
    %1319 = vmatmul.mubr.f32.gmra.mrb[0].mxu0 %v1175
    %v1320 = vpop.f32.mrb[0].mxu0
    %v1321 = vadd.f32 %v1252, %v1320
    %v1322 = vpop.f32.mrb[0].mxu0
    %1323 = vmatprep.mubr.f32.mxu0 %v1180
    %1324 = vmatmul.mubr.f32.gmra.mrb[0].mxu0 %v1179
    %v1325 = vpop.f32.mrb[0].mxu0
    %v1326 = vadd.f32 %v1252, %v1325
    %v1327 = vpop.f32.mrb[0].mxu0
    %1328 = vdwg.mxu0
    %1329 = vmatprep.subr.mxu0 0.0
    %1330 = vmatpush1.msra.mxu0 %v1215
    %1331 = vmatprep.subr.mxu0 0.0
    %1332 = vmatpush1.msra.mxu0 %v1216
    %1333 = vmatprep.subr.mxu0 0.0
    %1334 = vmatpush1.msra.mxu0 %v1217
    %1335 = vmatprep.subr.mxu0 0.0
    %1336 = vmatpush1.msra.mxu0 %v1218
    %1337 = vmatprep.subr.mxu0 0.0
    %1338 = vmatpush1.msra.mxu0 %v1219
    %1339 = vmatprep.subr.mxu0 0.0
    %1340 = vmatpush1.msra.mxu0 %v1220
    %1341 = vmatprep.subr.mxu0 0.0
    %1342 = vmatpush1.msra.mxu0 %v1221
    %1343 = vmatprep.subr.mxu0 0.0
    %1344 = vmatpush1.msra.mxu0 %v1222
    %1345 = vmatprep.subr.mxu0 0.0
    %1346 = vmatpush1.msra.mxu0 %v1223
    %1347 = vmatprep.subr.mxu0 0.0
    %1348 = vmatpush1.msra.mxu0 %v1224
    %1349 = vmatprep.subr.mxu0 0.0
    %1350 = vmatpush1.msra.mxu0 %v1225
    %1351 = vmatprep.subr.mxu0 0.0
    %1352 = vmatpush1.msra.mxu0 %v1226
    %1353 = vmatprep.subr.mxu0 0.0
    %1354 = vmatpush1.msra.mxu0 %v1227
    %1355 = vmatprep.subr.mxu0 0.0
    %1356 = vmatpush1.msra.mxu0 %v1228
    %1357 = vmatprep.subr.mxu0 0.0
    %1358 = vmatpush1.msra.mxu0 %v1229
    %1359 = vmatprep.subr.mxu0 0.0
    %1360 = vmatpush1.msra.mxu0 %v1230
    %1361 = vmatprep.subr.mxu0 0.0
    %1362 = vmatpush1.msra.mxu0 %v1231
    %1363 = vmatprep.subr.mxu0 0.0
    %1364 = vmatpush1.msra.mxu0 %v1232
    %1365 = vmatprep.subr.mxu0 0.0
    %1366 = vmatpush1.msra.mxu0 %v1233
    %1367 = vmatprep.subr.mxu0 0.0
    %1368 = vmatpush1.msra.mxu0 %v1234
    %1369 = vmatprep.subr.mxu0 0.0
    %1370 = vmatpush1.msra.mxu0 %v1235
    %1371 = vmatprep.subr.mxu0 0.0
    %1372 = vmatpush1.msra.mxu0 %v1236
    %1373 = vmatprep.subr.mxu0 0.0
    %1374 = vmatpush1.msra.mxu0 %v1237
    %1375 = vmatprep.subr.mxu0 0.0
    %1376 = vmatpush1.msra.mxu0 %v1238
    %1377 = vmatprep.subr.mxu0 0.0
    %1378 = vmatpush1.msra.mxu0 %v1239
    %1379 = vmatprep.subr.mxu0 0.0
    %1380 = vmatpush1.msra.mxu0 %v1240
    %1381 = vmatprep.subr.mxu0 0.0
    %1382 = vmatpush1.msra.mxu0 %v1241
    %1383 = vmatprep.subr.mxu0 0.0
    %1384 = vmatpush1.msra.mxu0 %v1242
    %1385 = vmatprep.subr.mxu0 0.0
    %1386 = vmatpush1.msra.mxu0 %v1243
    %1387 = vmatprep.subr.mxu0 0.0
    %1388 = vmatpush1.msra.mxu0 %v1244
    %1389 = vmatprep.subr.mxu0 0.0
    %1390 = vmatpush1.msra.mxu0 %v1245
    %1391 = vmatprep.subr.mxu0 0.0
    %1392 = vmatpush1.msra.mxu0 %v1246
    %1393 = vmatprep.mubr.f32.mxu0 %v1178
    %1394 = vmatmul.mubr.f32.gmra.mrb[0].mxu0 %v1177
    %v1395 = vpop.f32.mrb[0].mxu0
    %v1396 = vadd.f32 %v1321, %v1395
    %v1397 = vpop.f32.mrb[0].mxu0
    %1398 = vmatprep.mubr.f32.mxu0 %v1182
    %1399 = vmatmul.mubr.f32.gmra.mrb[0].mxu0 %v1181
    %v1400 = vpop.f32.mrb[0].mxu0
    %v1401 = vadd.f32 %v1326, %v1400
    %v1402 = vpop.f32.mrb[0].mxu0
    %1403 = vdwg.mxu0
    %vm1404 = vcmp.ge.f32.partialorder %v1396, 0.0
    %vm1405 = vcmp.ge.f32.partialorder %v1401, 0.0
    %v1406 = vmul.f32 %v1396, 0.02
    %v1407 = vmul.f32 %v1401, 0.02
    %v1408 = vsel %vm1404, %v1396, %v1406
    %v1409 = vsel %vm1405, %v1401, %v1407
    %v1410 = vadd.f32 %v1408, %v917
    %v1411 = vadd.f32 %v1409, %v918
    %v1412 = vld [vmem:[%s16] sm:$0x1]
    %v1413 = vld [vmem:[%s17] sm:$0x1]
    %1414 = vadd.xlane.f32.xlu0 %v1410
    %v1415 = vpop.xlane.xlu0 %1414
    %1416 = vadd.xlane.f32.xlu0 %v1411
    %v1417 = vpop.xlane.xlu0 %1416
    %v1418 = vmul.f32 %v1415, %v884
    %v1419 = vmul.f32 %v1417, %v884
    %v1420 = vsub.f32 %v1410, %v1418
    %v1421 = vsub.f32 %v1411, %v1419
    %v1422 = vmul.f32 %v1420, %v1420
    %v1423 = vmul.f32 %v1421, %v1421
    %1424 = vadd.xlane.f32.xlu0 %v1422
    %v1425 = vpop.xlane.xlu0 %1424
    %1426 = vadd.xlane.f32.xlu0 %v1423
    %v1427 = vpop.xlane.xlu0 %1426
    %v1428 = vmul.f32 %v1425, %v884
    %v1429 = vmul.f32 %v1427, %v884
    %v1430 = vadd.f32 %v1428, 1e-05
    %v1431 = vadd.f32 %v1429, 1e-05
    %v1432 = vrsqrt.pop %v1430
    %v1433 = vrsqrt.pop %v1431
    %v1434 = vmul.f32 %v1420, %v1432
    %v1435 = vmul.f32 %v1421, %v1433
    %v1437 = vlaneseq
    %v1438 = vshrl.u32 %v1437, 7
    %v1439 = vsub.s32 0, %v1438
    %v1440 = vrot.slane %v1412, %v1439
    %v1442 = vmul.f32 %v1434, %v1440
    %v1443 = vmul.f32 %v1435, %v1440
    %v1445 = vlaneseq
    %v1446 = vshrl.u32 %v1445, 7
    %v1447 = vsub.s32 0, %v1446
    %v1448 = vrot.slane %v1413, %v1447
    %v1450 = vadd.f32 %v1442, %v1448
    %v1451 = vadd.f32 %v1443, %v1448
    %1452 = vst [vmem:[#allocation16] sm:$0xff] %v1450
    %1453 = vst [vmem:[#allocation16 + $0x8] sm:$0xff] %v1451
    // Predicated region
    $region106: #{tpu_custom_call.1} parent=1 // pred_check
      _
    $region107: #{tpu_custom_call.1} parent=1 // pred_check_branch
      %1455 = sbr.rel (0) target = $region109
    $region108: #{tpu_custom_call.1} parent=1 // pred_region
      %s1457 = ssub.s32 256, 256
      %1458 = vsyncadd [#allocation4], %s1457
      %s1459 = sshll.u32 [#allocation16], 4
      %s1460 = int_to_ptr.vmem [resolvable:$true] %s1459
      %1465 = dma.vmem_to_hbm [thread:$0]  %s1460, 256, %s18, [#allocation4], 128, 128, 8
    $region109: #{tpu_custom_call.1} parent=1 // pred_fallthru
      _
    // Predicated region
    $region110: #{tpu_custom_call.1} parent=1 // pred_check
      _
    $region111: #{tpu_custom_call.1} parent=1 // pred_check_branch
      %1467 = sbr.rel (0) target = $region113
    $region112: #{tpu_custom_call.1} parent=1 // pred_region
      %1468 = dma.done [#allocation4], 256
    $region113: #{tpu_custom_call.1} parent=1 // pred_fallthru
      _
    %1469 = vsyncpa [#allocation3], 1
    %1470 = vsyncpa [#allocation6], 1
    %1471 = vsyncpa [#allocation9], 1
    %1472 = vsyncpa [#allocation12], 1
    %1473 = vsyncpa [#allocation15], 1
    %1474 = vsyncpa [#allocation4], 1

</llo_original>
